<compile_context>
chip_gen: v7x
topology: tpu7x:2x2x1
jax: 0.10.0
libtpu: 0.0.40
codegen_flags: <defaults>
</compile_context>

<pallas_src>
import math
from functools import partial

import jax
import jax.numpy as jnp
from jax import lax
from jax.experimental import pallas as pl
from jax.experimental.pallas import tpu as pltpu

EPS = 1e-5          # nn.LayerNorm default
_FFN_CHUNK = 512    # hidden-dim chunk width for the F-tiled FFN loop


def transformer_layer_kernel(xf_ref,
                             wq_ref, wkv_ref, bq_ref, bkv_ref,
                             wo_ref, bo_ref, g1_ref, be1_ref,
                             w1_ref, b1_ref, w2_ref, b2_ref,
                             g2_ref, be2_ref,
                             *rest, num_heads, tq, with_att):
    if with_att:
        out_ref, att_ref, k_sc, v_sc = rest
    else:
        out_ref, k_sc, v_sc = rest
        att_ref = None

    cdt = wq_ref.dtype                      # MXU compute dtype (bf16 or f32)
    _, S, E = xf_ref.shape
    H = num_heads
    Dh = E // H
    scale = 1.0 / math.sqrt(Dh)
    qi = pl.program_id(1)

    # ---- K/V for the whole sequence: fused [Wk | Wv] projection, computed
    # ---- once per batch element and stored head-major (H, S, Dh) in VMEM
    # ---- scratch (reshape/transpose hoisted out of the per-tile loop).
    @pl.when(qi == 0)
    def _():
        xf = xf_ref[0].astype(cdt)                              # (S, E)
        kv = jnp.dot(xf, wkv_ref[...],
                     preferred_element_type=jnp.float32) + bkv_ref[...]
        k_sc[...] = kv[:, :E].reshape(S, H, Dh).transpose(1, 0, 2).astype(cdt)
        v_sc[...] = kv[:, E:].reshape(S, H, Dh).transpose(1, 0, 2).astype(cdt)

    # ---- query tile sliced from the resident sequence block ----
    row0 = pl.multiple_of(qi * tq, tq)
    x_t = xf_ref[0, pl.ds(row0, tq), :]                         # (TQ, E)
    x_t_f32 = x_t.astype(jnp.float32)

    q = jnp.dot(x_t.astype(cdt), wq_ref[...],
                preferred_element_type=jnp.float32) + bq_ref[...]
    q = q * scale                                               # fold 1/sqrt(Dh)
    qh = q.reshape(tq, H, Dh).transpose(1, 0, 2).astype(cdt)    # (H, TQ, Dh)

    # ---- head-batched attention: (H,TQ,Dh) x (H,S,Dh) -> (H,TQ,S) ----
    scores = jnp.einsum("hqd,hkd->hqk", qh, k_sc[...],
                        preferred_element_type=jnp.float32)
    m = jnp.max(scores, axis=-1, keepdims=True)
    e = jnp.exp(scores - m)
    denom = jnp.sum(e, axis=-1, keepdims=True)
    if cdt == jnp.float32:
        p = e / denom                                # exact path
    else:
        p = e * pl.reciprocal(denom, approx=True)    # EUP, bf16 fast path
    if att_ref is not None:
        att_ref[0] = jnp.mean(p, axis=0).astype(att_ref.dtype)  # head-averaged

    ctx = jnp.einsum("hqk,hkd->hqd", p.astype(cdt), v_sc[...],
                     preferred_element_type=jnp.float32)        # (H, TQ, Dh)
    ctx = ctx.transpose(1, 0, 2).reshape(tq, E)

    # ---- output projection + residual + LayerNorm 1 (f32) ----
    attn_out = jnp.dot(ctx.astype(cdt), wo_ref[...],
                       preferred_element_type=jnp.float32) + bo_ref[...]
    r1 = attn_out + x_t_f32
    mu1 = jnp.mean(r1, axis=-1, keepdims=True)
    var1 = jnp.mean((r1 - mu1) ** 2, axis=-1, keepdims=True)
    n1 = (r1 - mu1) * lax.rsqrt(var1 + EPS) * g1_ref[...] + be1_ref[...]

    # ---- pointwise feed-forward (hidden dim F chunked) ----
    n1c = n1.astype(cdt)
    n_chunks = w1_ref.shape[0]

    def ffn_chunk(i, acc):
        h = jnp.dot(n1c, w1_ref[i], preferred_element_type=jnp.float32) + b1_ref[i]
        h = jnp.maximum(h, 0.0)                                 # ReLU
        return acc + jnp.dot(h.astype(cdt), w2_ref[i],
                             preferred_element_type=jnp.float32)

    acc0 = jnp.zeros((tq, E), jnp.float32)
    if n_chunks == 1:
        ffn = ffn_chunk(0, acc0)
    else:
        ffn = lax.fori_loop(0, n_chunks, ffn_chunk, acc0)
    ffn = ffn + b2_ref[...]

    # ---- residual + LayerNorm 2 (f32) ----
    r2 = ffn + n1
    mu2 = jnp.mean(r2, axis=-1, keepdims=True)
    var2 = jnp.mean((r2 - mu2) ** 2, axis=-1, keepdims=True)
    out_ref[0] = ((r2 - mu2) * lax.rsqrt(var2 + EPS)
                  * g2_ref[...] + be2_ref[...]).astype(out_ref.dtype)


# ---------------------------------------------------------------------------
# VMEM budgeting helpers
# ---------------------------------------------------------------------------
def _vmem_capacity_bytes():
    try:
        cap = getattr(pltpu.get_tpu_info(), "vmem_capacity_bytes", None)
        if cap:
            return int(cap)
    except Exception:
        pass
    return 64 << 20     # conservative default (v7x per-core VMEM)


def _tile_live_bytes(tq, S, E, Fc, H, with_att):
    return (3 * H * tq * S * 4              # scores / exp / probs (f32)
            + 4 * tq * E * 4                # q, ctx, residual/LN temporaries
            + tq * Fc * 4                   # FFN hidden chunk (f32)
            + 2 * tq * E * 4                # (1,TQ,E) out block, double-buffered
            + (2 * tq * S * 4 if with_att else 0))   # (1,TQ,S) att block


def _pick_tq(S, E, Fc, H, fixed_bytes, capacity, with_att):
    budget = int(0.85 * min(capacity, 128 << 20)) - fixed_bytes
    cands = [t for t in (512, 256, 128, 64, 32, 16, 8) if t <= S and S % t == 0]
    if not cands:
        cands = [S]
    for t in cands:
        if _tile_live_bytes(t, S, E, Fc, H, with_att) <= budget:
            return t
    return cands[-1]


def _vmem_limit_bytes(fixed_bytes, live_bytes, capacity):
    want = fixed_bytes + 2 * live_bytes + (8 << 20)
    return int(min(max(32 << 20, want), capacity, 128 << 20))


# ---------------------------------------------------------------------------
# pallas_call construction
# ---------------------------------------------------------------------------
def _make_call(B, S, E, TQ, num_heads, param_arrays, return_att, att_dtype,
               vmem_limit, cost):
    cdt = param_arrays[0].dtype
    Dh = E // num_heads

    def wspec(arr):
        # Constant across the whole grid (index map always zeros) -> re-DMA'd
        # never; default (double-buffered) residency accounted in the budget.
        return pl.BlockSpec(arr.shape, lambda b, qi, _n=arr.ndim: (0,) * _n)

    in_specs = [pl.BlockSpec((1, S, E), lambda b, qi: (b, 0, 0))]   # full seq
    in_specs += [wspec(a) for a in param_arrays]

    out_emb_spec = pl.BlockSpec((1, TQ, E), lambda b, qi: (b, qi, 0))
    out_emb_shape = jax.ShapeDtypeStruct((B, S, E), jnp.float32)
    if return_att:
        out_specs = (out_emb_spec,
                     pl.BlockSpec((1, TQ, S), lambda b, qi: (b, qi, 0)))
        out_shape = (out_emb_shape, jax.ShapeDtypeStruct((B, S, S), att_dtype))
    else:
        out_specs = out_emb_spec
        out_shape = out_emb_shape

    kern = partial(transformer_layer_kernel, num_heads=num_heads, tq=TQ,
                   with_att=return_att)
    return pl.pallas_call(
        kern,
        out_shape=out_shape,
        grid_spec=pltpu.PrefetchScalarGridSpec(
            num_scalar_prefetch=0,
            grid=(B, S // TQ),
            in_specs=in_specs,
            out_specs=out_specs,
            scratch_shapes=[pltpu.VMEM((num_heads, S, Dh), cdt),   # K (head-major)
                            pltpu.VMEM((num_heads, S, Dh), cdt)],  # V (head-major)
        ),
        compiler_params=pltpu.CompilerParams(
            # batch axis parallel (megacore); query-tile axis carries the K/V
            # scratch dependency -> "arbitrary".
            dimension_semantics=("parallel", "arbitrary"),
            vmem_limit_bytes=vmem_limit),
        cost_estimate=cost,
    )


def transformer_layer(x, params, num_heads, compute_dtype=jnp.bfloat16,
                      return_att=True, att_dtype=jnp.float32):
    """x: (B, S, E) float32.  Returns (emb (B,S,E) f32, att (B,S,S) or None)."""
    B, S, E = x.shape
    F = params["w1"].shape[1]
    assert E % num_heads == 0
    cdt = jnp.dtype(compute_dtype)
    f32 = jnp.float32

    # Fused [Wk | Wv] projection weights.
    wkv = jnp.concatenate([params["wk"], params["wv"]], axis=1).astype(cdt)
    bkv = jnp.concatenate([params["bk"], params["bv"]], axis=1).astype(f32)

    # F-chunked FFN weights: (nF, E, Fc) / (nF, 1, Fc) / (nF, Fc, E).
    n_chunks = F // _FFN_CHUNK if (F > _FFN_CHUNK and F % _FFN_CHUNK == 0) else 1
    Fc = F // n_chunks
    w1c = params["w1"].reshape(E, n_chunks, Fc).transpose(1, 0, 2).astype(cdt)
    b1c = params["b1"].reshape(1, n_chunks, Fc).transpose(1, 0, 2).astype(f32)
    w2c = params["w2"].reshape(n_chunks, Fc, E).astype(cdt)

    ordered = [
        params["wq"].astype(cdt), wkv,
        params["bq"].astype(f32), bkv,
        params["wo"].astype(cdt), params["bo"].astype(f32),
        params["g1"].astype(f32), params["be1"].astype(f32),
        w1c, b1c, w2c, params["b2"].astype(f32),
        params["g2"].astype(f32), params["be2"].astype(f32),
    ]

    # Single activation stream in compute dtype; the query tile (incl. the
    # residual) is sliced from this block inside the kernel.
    x_in = x.astype(cdt)

    capacity = _vmem_capacity_bytes()
    param_bytes = sum(int(a.size) * a.dtype.itemsize for a in ordered)
    fixed = (2 * S * E * x_in.dtype.itemsize    # (1,S,E) block, double-buffered
             + 2 * S * E * cdt.itemsize         # K/V head-major scratch
             + 2 * param_bytes)                 # weights (double-buffered)
    TQ = _pick_tq(S, E, Fc, num_heads, fixed, capacity, return_att)
    live = _tile_live_bytes(TQ, S, E, Fc, num_heads, return_att)
    vmem_limit = _vmem_limit_bytes(fixed, live, capacity)

    flops = 2 * B * S * (4 * E * E + 2 * S * E + 2 * E * F)
    transc = B * num_heads * S * S
    bytes_acc = (x_in.size * x_in.dtype.itemsize + param_bytes
                 + B * S * E * 4
                 + (B * S * S * jnp.dtype(att_dtype).itemsize if return_att else 0))
    cost = pl.CostEstimate(flops=int(flops), transcendentals=int(transc),
                           bytes_accessed=int(bytes_acc))

    call = _make_call(B, S, E, TQ, num_heads, ordered, return_att, att_dtype,
                      vmem_limit, cost)
    if return_att:
        emb, att = call(x_in, *ordered)
        return emb, att
    return call(x_in, *ordered), None


# ---------------------------------------------------------------------------
# Parameters & pure-JAX reference
# ---------------------------------------------------------------------------
def make_params(key, embed_dim, num_heads, fwd_dim):
    """Deterministic synthetic parameters (shapes match nn.MultiheadAttention /
    Linear / LayerNorm).  Projection weights stored pre-transposed so the
    kernel computes x @ W + b."""
    E, F = embed_dim, fwd_dim
    ks = jax.random.split(key, 8)
    s = 0.1
    return {
        "wq": jax.random.normal(ks[0], (E, E), jnp.float32) * s,
        "wk": jax.random.normal(ks[1], (E, E), jnp.float32) * s,
        "wv": jax.random.normal(ks[2], (E, E), jnp.float32) * s,
        "bq": jax.random.normal(ks[3], (1, E), jnp.float32) * s,
        "bk": jax.random.normal(ks[4], (1, E), jnp.float32) * s,
        "bv": jax.random.normal(ks[5], (1, E), jnp.float32) * s,
        "wo": jax.random.normal(ks[6], (E, E), jnp.float32) * s,
        "bo": jnp.zeros((1, E), jnp.float32),
        "g1": jnp.ones((1, E), jnp.float32),
        "be1": jnp.zeros((1, E), jnp.float32),
        "w1": jax.random.normal(ks[7], (E, F), jnp.float32) * s,
        "b1": jnp.zeros((1, F), jnp.float32),
        "w2": jax.random.normal(jax.random.fold_in(key, 99), (F, E), jnp.float32) * s,
        "b2": jnp.zeros((1, E), jnp.float32),
        "g2": jnp.ones((1, E), jnp.float32),
        "be2": jnp.zeros((1, E), jnp.float32),
    }


def reference(x, p, num_heads):
    """Pure-JAX f32 reference for sanity checking."""
    B, S, E = x.shape
    Dh = E // num_heads
    q = x @ p["wq"] + p["bq"][0]
    k = x @ p["wk"] + p["bk"][0]
    v = x @ p["wv"] + p["bv"][0]
    qh = q.reshape(B, S, num_heads, Dh).transpose(0, 2, 1, 3)
    kh = k.reshape(B, S, num_heads, Dh).transpose(0, 2, 1, 3)
    vh = v.reshape(B, S, num_heads, Dh).transpose(0, 2, 1, 3)
    scores = jnp.einsum("bhqd,bhkd->bhqk", qh, kh) / math.sqrt(Dh)
    att = jax.nn.softmax(scores, axis=-1)
    ctx = jnp.einsum("bhqk,bhkd->bhqd", att, vh).transpose(0, 2, 1, 3).reshape(B, S, E)
    attn_out = ctx @ p["wo"] + p["bo"][0]

    def ln(t, g, b):
        mu = t.mean(-1, keepdims=True)
        var = ((t - mu) ** 2).mean(-1, keepdims=True)
        return (t - mu) * lax.rsqrt(var + EPS) * g[0] + b[0]

    n1 = ln(attn_out + x, p["g1"], p["be1"])
    ffn = jnp.maximum(n1 @ p["w1"] + p["b1"][0], 0.0) @ p["w2"] + p["b2"][0]
    out = ln(ffn + n1, p["g2"], p["be2"])
    return out, att.mean(axis=1)


if __name__ == "__main__":
    B, S, E, H, F = 2, 8, 32, 4, 64
    key = jax.random.PRNGKey(0)
    kx, kp = jax.random.split(key)
    x = jax.random.normal(kx, (B, S, E), jnp.float32)
    params = make_params(kp, E, H, F)

    emb_ref, att_ref = reference(x, params, H)

    # f32 MXU path (exact divide) — tight-ish check.
    emb32, att32 = transformer_layer(x, params, H, compute_dtype=jnp.float32)
    emb32 = jax.block_until_ready(emb32)
    att32 = jax.block_until_ready(att32)
    assert emb32.shape == (B, S, E) and att32.shape == (B, S, S)
    assert jnp.allclose(emb32, emb_ref, atol=2e-2, rtol=2e-2)
    assert jnp.allclose(att32, att_ref, atol=1e-2, rtol=1e-2)

    # bf16 MXU fast path — loose check.
    emb16, att16 = transformer_layer(x, params, H)
    emb16 = jax.block_until_ready(emb16)
    att16 = jax.block_until_ready(att16)
    assert emb16.shape == (B, S, E) and att16.shape == (B, S, S)
    assert jnp.allclose(emb16, emb_ref, atol=6e-2, rtol=6e-2)
    assert jnp.allclose(att16, att_ref, atol=2e-2, rtol=2e-2)

    # F-chunked FFN path (F > _FFN_CHUNK) with the attention writeback skipped.
    F2 = 1024
    params2 = make_params(jax.random.fold_in(kp, 1), E, H, F2)
    emb_ref2, _ = reference(x, params2, H)
    emb_c, att_none = transformer_layer(x, params2, H, compute_dtype=jnp.float32,
                                        return_att=False)
    emb_c = jax.block_until_ready(emb_c)
    assert att_none is None and emb_c.shape == (B, S, E)
    assert jnp.allclose(emb_c, emb_ref2, atol=2e-2, rtol=2e-2)

    print("KERNEL_OK")
</pallas_src>

<mosaic_0001>
module attributes {stable_mosaic.version = 11 : i64} {
  func.func @transformer_layer_kernel(%arg0: i32, %arg1: i32, %arg2: memref<1x8x32xf32, #tpu.memory_space<vmem>>, %arg3: memref<32x32xf32, #tpu.memory_space<vmem>>, %arg4: memref<32x64xf32, #tpu.memory_space<vmem>>, %arg5: memref<1x32xf32, #tpu.memory_space<vmem>>, %arg6: memref<1x64xf32, #tpu.memory_space<vmem>>, %arg7: memref<32x32xf32, #tpu.memory_space<vmem>>, %arg8: memref<1x32xf32, #tpu.memory_space<vmem>>, %arg9: memref<1x32xf32, #tpu.memory_space<vmem>>, %arg10: memref<1x32xf32, #tpu.memory_space<vmem>>, %arg11: memref<1x32x64xf32, #tpu.memory_space<vmem>>, %arg12: memref<1x1x64xf32, #tpu.memory_space<vmem>>, %arg13: memref<1x64x32xf32, #tpu.memory_space<vmem>>, %arg14: memref<1x32xf32, #tpu.memory_space<vmem>>, %arg15: memref<1x32xf32, #tpu.memory_space<vmem>>, %arg16: memref<1x32xf32, #tpu.memory_space<vmem>>, %arg17: memref<1x8x32xf32, #tpu.memory_space<vmem>>, %arg18: memref<1x8x8xf32, #tpu.memory_space<vmem>>, %arg19: memref<4x8x8xf32, #tpu.memory_space<vmem>>, %arg20: memref<4x8x8xf32, #tpu.memory_space<vmem>>) attributes {dimension_semantics = [#tpu.dimension_semantics<parallel>, #tpu.dimension_semantics<arbitrary>], iteration_bounds = array<i64: 2, 1>, scalar_prefetch = 0 : i64, scratch_operands = 2 : i64, tpu.core_type = #tpu.core_type<tc>, window_params = [{transform_indices = @transform_0, window_bounds = array<i64: 1, 8, 32>}, {pipeline_mode = #tpu.pipeline_mode<synchronous>, transform_indices = @transform_1, window_bounds = array<i64: 32, 32>}, {pipeline_mode = #tpu.pipeline_mode<synchronous>, transform_indices = @transform_2, window_bounds = array<i64: 32, 64>}, {pipeline_mode = #tpu.pipeline_mode<synchronous>, transform_indices = @transform_3, window_bounds = array<i64: 1, 32>}, {pipeline_mode = #tpu.pipeline_mode<synchronous>, transform_indices = @transform_4, window_bounds = array<i64: 1, 64>}, {pipeline_mode = #tpu.pipeline_mode<synchronous>, transform_indices = @transform_5, window_bounds = array<i64: 32, 32>}, {pipeline_mode = #tpu.pipeline_mode<synchronous>, transform_indices = @transform_6, window_bounds = array<i64: 1, 32>}, {pipeline_mode = #tpu.pipeline_mode<synchronous>, transform_indices = @transform_7, window_bounds = array<i64: 1, 32>}, {pipeline_mode = #tpu.pipeline_mode<synchronous>, transform_indices = @transform_8, window_bounds = array<i64: 1, 32>}, {pipeline_mode = #tpu.pipeline_mode<synchronous>, transform_indices = @transform_9, window_bounds = array<i64: 1, 32, 64>}, {pipeline_mode = #tpu.pipeline_mode<synchronous>, transform_indices = @transform_10, window_bounds = array<i64: 1, 1, 64>}, {pipeline_mode = #tpu.pipeline_mode<synchronous>, transform_indices = @transform_11, window_bounds = array<i64: 1, 64, 32>}, {pipeline_mode = #tpu.pipeline_mode<synchronous>, transform_indices = @transform_12, window_bounds = array<i64: 1, 32>}, {pipeline_mode = #tpu.pipeline_mode<synchronous>, transform_indices = @transform_13, window_bounds = array<i64: 1, 32>}, {pipeline_mode = #tpu.pipeline_mode<synchronous>, transform_indices = @transform_14, window_bounds = array<i64: 1, 32>}, {transform_indices = @transform_15, window_bounds = array<i64: 1, 8, 32>}, {transform_indices = @transform_16, window_bounds = array<i64: 1, 8, 8>}]} {
    %c0_i32 = arith.constant 0 : i32
    %0 = arith.cmpi eq, %arg1, %c0_i32 : i32
    %1 = arith.extui %0 : i1 to i32
    %c0_i32_0 = arith.constant 0 : i32
    %2 = arith.cmpi ne, %1, %c0_i32_0 : i32
    scf.if %2 {
      %c0_63 = arith.constant 0 : index
      %c0_64 = arith.constant 0 : index
      %c0_65 = arith.constant 0 : index
      %113 = vector.load %arg2[%c0_63, %c0_64, %c0_65] : memref<1x8x32xf32, #tpu.memory_space<vmem>>, vector<1x8x32xf32>
      %114 = vector.shape_cast %113 : vector<1x8x32xf32> to vector<8x32xf32>
      %c0_66 = arith.constant 0 : index
      %c0_67 = arith.constant 0 : index
      %115 = vector.load %arg4[%c0_66, %c0_67] : memref<32x64xf32, #tpu.memory_space<vmem>>, vector<32x64xf32>
      %cst_68 = arith.constant dense<0.000000e+00> : vector<8x64xf32>
      %116 = tpu.matmul %114, %115, %cst_68 {dimension_numbers = #tpu.dot_dimension_numbers<[1], [0], [0], [1], [0, 0, 1, 1], [], []>} : vector<8x32xf32>, vector<32x64xf32>, vector<8x64xf32> -> vector<8x64xf32>
      %c0_69 = arith.constant 0 : index
      %c0_70 = arith.constant 0 : index
      %117 = vector.load %arg6[%c0_69, %c0_70] : memref<1x64xf32, #tpu.memory_space<vmem>>, vector<1x64xf32>
      %118 = vector.broadcast %117 : vector<1x64xf32> to vector<8x64xf32>
      %119 = arith.addf %116, %118 : vector<8x64xf32>
      %120 = vector.extract_strided_slice %119 {offsets = [0, 0], sizes = [8, 32], strides = [1, 1]} : vector<8x64xf32> to vector<8x32xf32>
      %121 = vector.shape_cast %120 : vector<8x32xf32> to vector<8x4x8xf32>
      %122 = tpu.transpose %121, [1, 0, 2] : vector<8x4x8xf32> -> vector<4x8x8xf32>
      %c0_71 = arith.constant 0 : index
      %c0_72 = arith.constant 0 : index
      %c0_73 = arith.constant 0 : index
      %123 = vector.load %arg19[%c0_71, %c0_72, %c0_73] : memref<4x8x8xf32, #tpu.memory_space<vmem>>, vector<4x8x8xf32>
      tpu.vector_store %arg19[%c0_71, %c0_72, %c0_73], %122 {strides = array<i32>} : memref<4x8x8xf32, #tpu.memory_space<vmem>>, vector<4x8x8xf32>,
      %124 = vector.extract_strided_slice %119 {offsets = [0, 32], sizes = [8, 32], strides = [1, 1]} : vector<8x64xf32> to vector<8x32xf32>
      %125 = vector.shape_cast %124 : vector<8x32xf32> to vector<8x4x8xf32>
      %126 = tpu.transpose %125, [1, 0, 2] : vector<8x4x8xf32> -> vector<4x8x8xf32>
      %c0_74 = arith.constant 0 : index
      %c0_75 = arith.constant 0 : index
      %c0_76 = arith.constant 0 : index
      %127 = vector.load %arg20[%c0_74, %c0_75, %c0_76] : memref<4x8x8xf32, #tpu.memory_space<vmem>>, vector<4x8x8xf32>
      tpu.vector_store %arg20[%c0_74, %c0_75, %c0_76], %126 {strides = array<i32>} : memref<4x8x8xf32, #tpu.memory_space<vmem>>, vector<4x8x8xf32>,
    } else {
    }
    %c8_i32 = arith.constant 8 : i32
    %3 = arith.muli %arg1, %c8_i32 : i32
    %4 = tpu.assume_multiple %3, 8 : i32
    %c0 = arith.constant 0 : index
    %5 = arith.index_cast %4 : i32 to index
    %c0_1 = arith.constant 0 : index
    %6 = vector.load %arg2[%c0, %5, %c0_1] : memref<1x8x32xf32, #tpu.memory_space<vmem>>, vector<1x8x32xf32>
    %7 = vector.shape_cast %6 : vector<1x8x32xf32> to vector<8x32xf32>
    %c0_2 = arith.constant 0 : index
    %c0_3 = arith.constant 0 : index
    %8 = vector.load %arg3[%c0_2, %c0_3] : memref<32x32xf32, #tpu.memory_space<vmem>>, vector<32x32xf32>
    %cst = arith.constant dense<0.000000e+00> : vector<8x32xf32>
    %9 = tpu.matmul %7, %8, %cst {dimension_numbers = #tpu.dot_dimension_numbers<[1], [0], [0], [1], [0, 0, 1, 1], [], []>} : vector<8x32xf32>, vector<32x32xf32>, vector<8x32xf32> -> vector<8x32xf32>
    %c0_4 = arith.constant 0 : index
    %c0_5 = arith.constant 0 : index
    %10 = vector.load %arg5[%c0_4, %c0_5] : memref<1x32xf32, #tpu.memory_space<vmem>>, vector<1x32xf32>
    %11 = vector.broadcast %10 : vector<1x32xf32> to vector<8x32xf32>
    %12 = arith.addf %9, %11 : vector<8x32xf32>
    %cst_6 = arith.constant 0.353553385 : f32
    %13 = vector.broadcast %cst_6 : f32 to vector<8x32xf32>
    %14 = arith.mulf %12, %13 : vector<8x32xf32>
    %15 = vector.shape_cast %14 : vector<8x32xf32> to vector<8x4x8xf32>
    %16 = tpu.transpose %15, [1, 0, 2] : vector<8x4x8xf32> -> vector<4x8x8xf32>
    %c0_7 = arith.constant 0 : index
    %c0_8 = arith.constant 0 : index
    %c0_9 = arith.constant 0 : index
    %17 = vector.load %arg19[%c0_7, %c0_8, %c0_9] : memref<4x8x8xf32, #tpu.memory_space<vmem>>, vector<4x8x8xf32>
    "tpu.trace_start"() <{level = 10 : i32, message = "hqd,hkd->hqk"}> : () -> ()
    %cst_10 = arith.constant dense<0.000000e+00> : vector<4x8x8xf32>
    %18 = tpu.matmul %16, %17, %cst_10 {dimension_numbers = #tpu.dot_dimension_numbers<[2], [2], [1], [1], [0, 0, 0, 1, 1, 1], [0], [0]>} : vector<4x8x8xf32>, vector<4x8x8xf32>, vector<4x8x8xf32> -> vector<4x8x8xf32>
    "tpu.trace_stop"() : () -> ()
    %cst_11 = arith.constant dense<0xFF800000> : vector<4x8xf32>
    %19 = vector.multi_reduction <maximumf>, %18, %cst_11 [2] : vector<4x8x8xf32> to vector<4x8xf32>
    %20 = vector.shape_cast %19 : vector<4x8xf32> to vector<4x8x1xf32>
    %21 = vector.broadcast %20 : vector<4x8x1xf32> to vector<4x8x8xf32>
    %22 = arith.subf %18, %21 : vector<4x8x8xf32>
    %23 = math.exp %22 : vector<4x8x8xf32>
    %cst_12 = arith.constant dense<0.000000e+00> : vector<4x8xf32>
    %24 = vector.multi_reduction <add>, %23, %cst_12 [2] : vector<4x8x8xf32> to vector<4x8xf32>
    %25 = vector.shape_cast %24 : vector<4x8xf32> to vector<4x8x1xf32>
    %26 = vector.broadcast %25 : vector<4x8x1xf32> to vector<4x8x8xf32>
    %27 = arith.divf %23, %26 : vector<4x8x8xf32>
    %cst_13 = arith.constant dense<0.000000e+00> : vector<8x8xf32>
    %28 = vector.multi_reduction <add>, %27, %cst_13 [0] : vector<4x8x8xf32> to vector<8x8xf32>
    %cst_14 = arith.constant 4.000000e+00 : f32
    %29 = vector.broadcast %cst_14 : f32 to vector<8x8xf32>
    %30 = arith.divf %28, %29 : vector<8x8xf32>
    %c0_15 = arith.constant 0 : index
    %c0_16 = arith.constant 0 : index
    %c0_17 = arith.constant 0 : index
    %31 = vector.load %arg18[%c0_15, %c0_16, %c0_17] : memref<1x8x8xf32, #tpu.memory_space<vmem>>, vector<1x8x8xf32>
    %32 = vector.shape_cast %31 : vector<1x8x8xf32> to vector<8x8xf32>
    %33 = vector.shape_cast %30 : vector<8x8xf32> to vector<1x8x8xf32>
    tpu.vector_store %arg18[%c0_15, %c0_16, %c0_17], %33 {strides = array<i32>} : memref<1x8x8xf32, #tpu.memory_space<vmem>>, vector<1x8x8xf32>,
    %c0_18 = arith.constant 0 : index
    %c0_19 = arith.constant 0 : index
    %c0_20 = arith.constant 0 : index
    %34 = vector.load %arg20[%c0_18, %c0_19, %c0_20] : memref<4x8x8xf32, #tpu.memory_space<vmem>>, vector<4x8x8xf32>
    "tpu.trace_start"() <{level = 10 : i32, message = "hqk,hkd->hqd"}> : () -> ()
    %cst_21 = arith.constant dense<0.000000e+00> : vector<4x8x8xf32>
    %35 = tpu.matmul %27, %34, %cst_21 {dimension_numbers = #tpu.dot_dimension_numbers<[2], [1], [1], [2], [0, 0, 0, 1, 1, 2], [0], [0]>} : vector<4x8x8xf32>, vector<4x8x8xf32>, vector<4x8x8xf32> -> vector<4x8x8xf32>
    "tpu.trace_stop"() : () -> ()
    %36 = tpu.transpose %35, [1, 0, 2] : vector<4x8x8xf32> -> vector<8x4x8xf32>
    %37 = vector.shape_cast %36 : vector<8x4x8xf32> to vector<8x32xf32>
    %c0_22 = arith.constant 0 : index
    %c0_23 = arith.constant 0 : index
    %38 = vector.load %arg7[%c0_22, %c0_23] : memref<32x32xf32, #tpu.memory_space<vmem>>, vector<32x32xf32>
    %cst_24 = arith.constant dense<0.000000e+00> : vector<8x32xf32>
    %39 = tpu.matmul %37, %38, %cst_24 {dimension_numbers = #tpu.dot_dimension_numbers<[1], [0], [0], [1], [0, 0, 1, 1], [], []>} : vector<8x32xf32>, vector<32x32xf32>, vector<8x32xf32> -> vector<8x32xf32>
    %c0_25 = arith.constant 0 : index
    %c0_26 = arith.constant 0 : index
    %40 = vector.load %arg8[%c0_25, %c0_26] : memref<1x32xf32, #tpu.memory_space<vmem>>, vector<1x32xf32>
    %41 = vector.broadcast %40 : vector<1x32xf32> to vector<8x32xf32>
    %42 = arith.addf %39, %41 : vector<8x32xf32>
    %43 = arith.addf %42, %7 : vector<8x32xf32>
    %cst_27 = arith.constant dense<0.000000e+00> : vector<8xf32>
    %44 = vector.multi_reduction <add>, %43, %cst_27 [1] : vector<8x32xf32> to vector<8xf32>
    %45 = vector.shape_cast %44 : vector<8xf32> to vector<8x1xf32>
    %cst_28 = arith.constant 3.200000e+01 : f32
    %46 = vector.broadcast %cst_28 : f32 to vector<8x1xf32>
    %47 = arith.divf %45, %46 : vector<8x1xf32>
    %48 = vector.broadcast %47 : vector<8x1xf32> to vector<8x32xf32>
    %49 = arith.subf %43, %48 : vector<8x32xf32>
    %50 = arith.mulf %49, %49 : vector<8x32xf32>
    %cst_29 = arith.constant dense<0.000000e+00> : vector<8xf32>
    %51 = vector.multi_reduction <add>, %50, %cst_29 [1] : vector<8x32xf32> to vector<8xf32>
    %52 = vector.shape_cast %51 : vector<8xf32> to vector<8x1xf32>
    %cst_30 = arith.constant 3.200000e+01 : f32
    %53 = vector.broadcast %cst_30 : f32 to vector<8x1xf32>
    %54 = arith.divf %52, %53 : vector<8x1xf32>
    %55 = vector.broadcast %47 : vector<8x1xf32> to vector<8x32xf32>
    %56 = arith.subf %43, %55 : vector<8x32xf32>
    %cst_31 = arith.constant 9.99999974E-6 : f32
    %57 = vector.broadcast %cst_31 : f32 to vector<8x1xf32>
    %58 = arith.addf %54, %57 : vector<8x1xf32>
    %59 = math.rsqrt %58 : vector<8x1xf32>
    %60 = vector.broadcast %59 : vector<8x1xf32> to vector<8x32xf32>
    %61 = arith.mulf %56, %60 : vector<8x32xf32>
    %c0_32 = arith.constant 0 : index
    %c0_33 = arith.constant 0 : index
    %62 = vector.load %arg9[%c0_32, %c0_33] : memref<1x32xf32, #tpu.memory_space<vmem>>, vector<1x32xf32>
    %63 = vector.broadcast %62 : vector<1x32xf32> to vector<8x32xf32>
    %64 = arith.mulf %61, %63 : vector<8x32xf32>
    %c0_34 = arith.constant 0 : index
    %c0_35 = arith.constant 0 : index
    %65 = vector.load %arg10[%c0_34, %c0_35] : memref<1x32xf32, #tpu.memory_space<vmem>>, vector<1x32xf32>
    %66 = vector.broadcast %65 : vector<1x32xf32> to vector<8x32xf32>
    %67 = arith.addf %64, %66 : vector<8x32xf32>
    %cst_36 = arith.constant 0.000000e+00 : f32
    %68 = vector.broadcast %cst_36 : f32 to vector<8x32xf32>
    %c0_37 = arith.constant 0 : index
    %c0_38 = arith.constant 0 : index
    %c0_39 = arith.constant 0 : index
    %69 = vector.load %arg11[%c0_37, %c0_38, %c0_39] : memref<1x32x64xf32, #tpu.memory_space<vmem>>, vector<1x32x64xf32>
    %70 = vector.shape_cast %69 : vector<1x32x64xf32> to vector<32x64xf32>
    %cst_40 = arith.constant dense<0.000000e+00> : vector<8x64xf32>
    %71 = tpu.matmul %67, %70, %cst_40 {dimension_numbers = #tpu.dot_dimension_numbers<[1], [0], [0], [1], [0, 0, 1, 1], [], []>} : vector<8x32xf32>, vector<32x64xf32>, vector<8x64xf32> -> vector<8x64xf32>
    %c0_41 = arith.constant 0 : index
    %c0_42 = arith.constant 0 : index
    %c0_43 = arith.constant 0 : index
    %72 = vector.load %arg12[%c0_41, %c0_42, %c0_43] : memref<1x1x64xf32, #tpu.memory_space<vmem>>, vector<1x1x64xf32>
    %73 = vector.shape_cast %72 : vector<1x1x64xf32> to vector<1x64xf32>
    %74 = vector.broadcast %73 : vector<1x64xf32> to vector<8x64xf32>
    %75 = arith.addf %71, %74 : vector<8x64xf32>
    %cst_44 = arith.constant 0.000000e+00 : f32
    %76 = vector.broadcast %cst_44 : f32 to vector<8x64xf32>
    %77 = arith.maximumf %75, %76 : vector<8x64xf32>
    %c0_45 = arith.constant 0 : index
    %c0_46 = arith.constant 0 : index
    %c0_47 = arith.constant 0 : index
    %78 = vector.load %arg13[%c0_45, %c0_46, %c0_47] : memref<1x64x32xf32, #tpu.memory_space<vmem>>, vector<1x64x32xf32>
    %79 = vector.shape_cast %78 : vector<1x64x32xf32> to vector<64x32xf32>
    %cst_48 = arith.constant dense<0.000000e+00> : vector<8x32xf32>
    %80 = tpu.matmul %77, %79, %cst_48 {dimension_numbers = #tpu.dot_dimension_numbers<[1], [0], [0], [1], [0, 0, 1, 1], [], []>} : vector<8x64xf32>, vector<64x32xf32>, vector<8x32xf32> -> vector<8x32xf32>
    %81 = arith.addf %68, %80 : vector<8x32xf32>
    %c0_49 = arith.constant 0 : index
    %c0_50 = arith.constant 0 : index
    %82 = vector.load %arg14[%c0_49, %c0_50] : memref<1x32xf32, #tpu.memory_space<vmem>>, vector<1x32xf32>
    %83 = vector.broadcast %82 : vector<1x32xf32> to vector<8x32xf32>
    %84 = arith.addf %81, %83 : vector<8x32xf32>
    %85 = arith.addf %84, %67 : vector<8x32xf32>
    %cst_51 = arith.constant dense<0.000000e+00> : vector<8xf32>
    %86 = vector.multi_reduction <add>, %85, %cst_51 [1] : vector<8x32xf32> to vector<8xf32>
    %87 = vector.shape_cast %86 : vector<8xf32> to vector<8x1xf32>
    %cst_52 = arith.constant 3.200000e+01 : f32
    %88 = vector.broadcast %cst_52 : f32 to vector<8x1xf32>
    %89 = arith.divf %87, %88 : vector<8x1xf32>
    %90 = vector.broadcast %89 : vector<8x1xf32> to vector<8x32xf32>
    %91 = arith.subf %85, %90 : vector<8x32xf32>
    %92 = arith.mulf %91, %91 : vector<8x32xf32>
    %cst_53 = arith.constant dense<0.000000e+00> : vector<8xf32>
    %93 = vector.multi_reduction <add>, %92, %cst_53 [1] : vector<8x32xf32> to vector<8xf32>
    %94 = vector.shape_cast %93 : vector<8xf32> to vector<8x1xf32>
    %cst_54 = arith.constant 3.200000e+01 : f32
    %95 = vector.broadcast %cst_54 : f32 to vector<8x1xf32>
    %96 = arith.divf %94, %95 : vector<8x1xf32>
    %97 = vector.broadcast %89 : vector<8x1xf32> to vector<8x32xf32>
    %98 = arith.subf %85, %97 : vector<8x32xf32>
    %cst_55 = arith.constant 9.99999974E-6 : f32
    %99 = vector.broadcast %cst_55 : f32 to vector<8x1xf32>
    %100 = arith.addf %96, %99 : vector<8x1xf32>
    %101 = math.rsqrt %100 : vector<8x1xf32>
    %102 = vector.broadcast %101 : vector<8x1xf32> to vector<8x32xf32>
    %103 = arith.mulf %98, %102 : vector<8x32xf32>
    %c0_56 = arith.constant 0 : index
    %c0_57 = arith.constant 0 : index
    %104 = vector.load %arg15[%c0_56, %c0_57] : memref<1x32xf32, #tpu.memory_space<vmem>>, vector<1x32xf32>
    %105 = vector.broadcast %104 : vector<1x32xf32> to vector<8x32xf32>
    %106 = arith.mulf %103, %105 : vector<8x32xf32>
    %c0_58 = arith.constant 0 : index
    %c0_59 = arith.constant 0 : index
    %107 = vector.load %arg16[%c0_58, %c0_59] : memref<1x32xf32, #tpu.memory_space<vmem>>, vector<1x32xf32>
    %108 = vector.broadcast %107 : vector<1x32xf32> to vector<8x32xf32>
    %109 = arith.addf %106, %108 : vector<8x32xf32>
    %c0_60 = arith.constant 0 : index
    %c0_61 = arith.constant 0 : index
    %c0_62 = arith.constant 0 : index
    %110 = vector.load %arg17[%c0_60, %c0_61, %c0_62] : memref<1x8x32xf32, #tpu.memory_space<vmem>>, vector<1x8x32xf32>
    %111 = vector.shape_cast %110 : vector<1x8x32xf32> to vector<8x32xf32>
    %112 = vector.shape_cast %109 : vector<8x32xf32> to vector<1x8x32xf32>
    tpu.vector_store %arg17[%c0_60, %c0_61, %c0_62], %112 {strides = array<i32>} : memref<1x8x32xf32, #tpu.memory_space<vmem>>, vector<1x8x32xf32>,
    return
  }
  func.func @transform_0(%arg0: i32, %arg1: i32) -> (i32, i32, i32) {
    %c0_i32 = arith.constant 0 : i32
    %c0_i32_0 = arith.constant 0 : i32
    %c0_i32_1 = arith.constant 0 : i32
    return %arg0, %c0_i32, %c0_i32_0 : i32, i32, i32
  }
  func.func @transform_1(%arg0: i32, %arg1: i32) -> (i32, i32) {
    %c0_i32 = arith.constant 0 : i32
    %c0_i32_0 = arith.constant 0 : i32
    %c0_i32_1 = arith.constant 0 : i32
    return %c0_i32, %c0_i32_0 : i32, i32
  }
  func.func @transform_2(%arg0: i32, %arg1: i32) -> (i32, i32) {
    %c0_i32 = arith.constant 0 : i32
    %c0_i32_0 = arith.constant 0 : i32
    %c0_i32_1 = arith.constant 0 : i32
    return %c0_i32, %c0_i32_0 : i32, i32
  }
  func.func @transform_3(%arg0: i32, %arg1: i32) -> (i32, i32) {
    %c0_i32 = arith.constant 0 : i32
    %c0_i32_0 = arith.constant 0 : i32
    %c0_i32_1 = arith.constant 0 : i32
    return %c0_i32, %c0_i32_0 : i32, i32
  }
  func.func @transform_4(%arg0: i32, %arg1: i32) -> (i32, i32) {
    %c0_i32 = arith.constant 0 : i32
    %c0_i32_0 = arith.constant 0 : i32
    %c0_i32_1 = arith.constant 0 : i32
    return %c0_i32, %c0_i32_0 : i32, i32
  }
  func.func @transform_5(%arg0: i32, %arg1: i32) -> (i32, i32) {
    %c0_i32 = arith.constant 0 : i32
    %c0_i32_0 = arith.constant 0 : i32
    %c0_i32_1 = arith.constant 0 : i32
    return %c0_i32, %c0_i32_0 : i32, i32
  }
  func.func @transform_6(%arg0: i32, %arg1: i32) -> (i32, i32) {
    %c0_i32 = arith.constant 0 : i32
    %c0_i32_0 = arith.constant 0 : i32
    %c0_i32_1 = arith.constant 0 : i32
    return %c0_i32, %c0_i32_0 : i32, i32
  }
  func.func @transform_7(%arg0: i32, %arg1: i32) -> (i32, i32) {
    %c0_i32 = arith.constant 0 : i32
    %c0_i32_0 = arith.constant 0 : i32
    %c0_i32_1 = arith.constant 0 : i32
    return %c0_i32, %c0_i32_0 : i32, i32
  }
  func.func @transform_8(%arg0: i32, %arg1: i32) -> (i32, i32) {
    %c0_i32 = arith.constant 0 : i32
    %c0_i32_0 = arith.constant 0 : i32
    %c0_i32_1 = arith.constant 0 : i32
    return %c0_i32, %c0_i32_0 : i32, i32
  }
  func.func @transform_9(%arg0: i32, %arg1: i32) -> (i32, i32, i32) {
    %c0_i32 = arith.constant 0 : i32
    %c0_i32_0 = arith.constant 0 : i32
    %c0_i32_1 = arith.constant 0 : i32
    %c0_i32_2 = arith.constant 0 : i32
    return %c0_i32, %c0_i32_0, %c0_i32_1 : i32, i32, i32
  }
  func.func @transform_10(%arg0: i32, %arg1: i32) -> (i32, i32, i32) {
    %c0_i32 = arith.constant 0 : i32
    %c0_i32_0 = arith.constant 0 : i32
    %c0_i32_1 = arith.constant 0 : i32
    %c0_i32_2 = arith.constant 0 : i32
    return %c0_i32, %c0_i32_0, %c0_i32_1 : i32, i32, i32
  }
  func.func @transform_11(%arg0: i32, %arg1: i32) -> (i32, i32, i32) {
    %c0_i32 = arith.constant 0 : i32
    %c0_i32_0 = arith.constant 0 : i32
    %c0_i32_1 = arith.constant 0 : i32
    %c0_i32_2 = arith.constant 0 : i32
    return %c0_i32, %c0_i32_0, %c0_i32_1 : i32, i32, i32
  }
  func.func @transform_12(%arg0: i32, %arg1: i32) -> (i32, i32) {
    %c0_i32 = arith.constant 0 : i32
    %c0_i32_0 = arith.constant 0 : i32
    %c0_i32_1 = arith.constant 0 : i32
    return %c0_i32, %c0_i32_0 : i32, i32
  }
  func.func @transform_13(%arg0: i32, %arg1: i32) -> (i32, i32) {
    %c0_i32 = arith.constant 0 : i32
    %c0_i32_0 = arith.constant 0 : i32
    %c0_i32_1 = arith.constant 0 : i32
    return %c0_i32, %c0_i32_0 : i32, i32
  }
  func.func @transform_14(%arg0: i32, %arg1: i32) -> (i32, i32) {
    %c0_i32 = arith.constant 0 : i32
    %c0_i32_0 = arith.constant 0 : i32
    %c0_i32_1 = arith.constant 0 : i32
    return %c0_i32, %c0_i32_0 : i32, i32
  }
  func.func @transform_15(%arg0: i32, %arg1: i32) -> (i32, i32, i32) {
    %c0_i32 = arith.constant 0 : i32
    %c0_i32_0 = arith.constant 0 : i32
    return %arg0, %arg1, %c0_i32 : i32, i32, i32
  }
  func.func @transform_16(%arg0: i32, %arg1: i32) -> (i32, i32, i32) {
    %c0_i32 = arith.constant 0 : i32
    %c0_i32_0 = arith.constant 0 : i32
    return %arg0, %arg1, %c0_i32 : i32, i32, i32
  }
}

</mosaic_0001>

<llo_original>
// kernel: tpu_custom_call.1
$region0: #{tpu_custom_call.1}
  #allocation0 [shape = 'u32[]', space=smem, size = 0x4, offset = 0x4, fixed_abs, tag = 'smem constant byte address 0x4 - core index']
  #allocation1 [shape = 'u32[144,128]{1,0:T(1,128)}', space=vmem, size = 0x12000, scoped, tag = 'internal scratch']
  #allocation2 [shape = 'f32[4,8,8]{2,1,0:T(8,128)}', space=vmem, size = 0x4000, scoped, tag = 'scratch operand']
  #allocation3 [shape = 'f32[4,8,8]{2,1,0:T(8,128)}', space=vmem, size = 0x4000, scoped, tag = 'scratch operand']
  %s0 = inlined_call_operand.hbm [shape: f32[2,8,32], index: 0, kind: input, shape index: {}]
  %s1 = inlined_call_operand.vmem [shape: f32[32,32], index: 1, kind: input, shape index: {}]
  %s2 = inlined_call_operand.vmem [shape: f32[32,64], index: 2, kind: input, shape index: {}]
  %s3 = inlined_call_operand.vmem [shape: f32[1,32], index: 3, kind: input, shape index: {}]
  %s4 = inlined_call_operand.vmem [shape: f32[1,64], index: 4, kind: input, shape index: {}]
  %s5 = inlined_call_operand.vmem [shape: f32[32,32], index: 5, kind: input, shape index: {}]
  %s6 = inlined_call_operand.vmem [shape: f32[1,32], index: 6, kind: input, shape index: {}]
  %s7 = inlined_call_operand.vmem [shape: f32[1,32], index: 7, kind: input, shape index: {}]
  %s8 = inlined_call_operand.vmem [shape: f32[1,32], index: 8, kind: input, shape index: {}]
  %s9 = inlined_call_operand.hbm [shape: f32[1,32,64], index: 9, kind: input, shape index: {}]
  %s10 = inlined_call_operand.vmem [shape: f32[1,1,64], index: 10, kind: input, shape index: {}]
  %s11 = inlined_call_operand.vmem [shape: f32[1,64,32], index: 11, kind: input, shape index: {}]
  %s12 = inlined_call_operand.vmem [shape: f32[1,32], index: 12, kind: input, shape index: {}]
  %s13 = inlined_call_operand.vmem [shape: f32[1,32], index: 13, kind: input, shape index: {}]
  %s14 = inlined_call_operand.vmem [shape: f32[1,32], index: 14, kind: input, shape index: {}]
  %s15 = inlined_call_operand.hbm [shape: f32[2,8,32], index: 15, kind: output, shape index: {0}]
  %s16 = inlined_call_operand.hbm [shape: f32[2,8,8], index: 16, kind: output, shape index: {1}]
  %17 = xla_tuple %s15, %s16
  %s18 = sld [smem:[#allocation0]]
  $region113: #{tpu_custom_call.1} parent=0
    _
  %s20 = ssub.s32 1, %s18
  %s21 = scalar_select 0, %s20, %s18
  $region1: #{tpu_custom_call.1} parent=0
    #allocation4 [shape = 'u8[8192]{0}', space=vmem, size = 0x2000, scoped, tag = 'input window, operand 0']
    #allocation5 [shape = 's32[2]{0}', space=sflag, size = 0x8, scoped, tag = 'scoped memory for tpu_custom_call.1']
    #allocation6 [shape = 's32[2]{0}', space=sflag, size = 0x8, scoped, tag = 'scoped memory for tpu_custom_call.1']
    #allocation7 [shape = 'u8[16384]{0}', space=vmem, size = 0x4000, scoped, tag = 'input window, operand 9, single buffered']
    #allocation8 [shape = 's32[1]{0}', space=sflag, size = 0x4, scoped, tag = 'scoped memory for tpu_custom_call.1']
    #allocation9 [shape = 'u8[8192]{0}', space=vmem, size = 0x2000, scoped, tag = 'output window, operand 0']
    #allocation10 [shape = 'u8[8192]{0}', space=vmem, size = 0x2000, scoped, tag = 'output window, operand 1']
    #allocation11 [shape = 's32[2]{0}', space=sflag, size = 0x8, scoped, tag = 'scoped memory for tpu_custom_call.1']
    %22 = vsyncpa [#allocation5], 0
    %s23 = scalar_lea.sflag [#allocation5], 1
    %24 = vsyncpa %s23, 0
    %25 = vsyncpa [#allocation8], 0
    %26 = vsyncpa [#allocation6], 0
    %s27 = scalar_lea.sflag [#allocation6], 1
    %28 = vsyncpa %s27, 0
    %29 = vsyncpa [#allocation11], 0
    %s30 = scalar_lea.sflag [#allocation11], 1
    %31 = vsyncpa %s30, 0
    loop: start=0, step=1, limit=4
    $region2: #{tpu_custom_call.1} parent=1 // loop_pre_header
      _
    $region3: #{tpu_custom_call.1} parent=1 // loop_header
      %s33 = sphi 0, %s37
      %p34 = scmp.ge.s32.totalorder %s33, 4
      %s40 = sphi 0, %s52
      %s41 = sphi 0, %s48
      %s42 = sphi 0, %s40
      %s43 = sphi 0, %s41
      %s44 = sphi 0, %s42
      %s45 = sphi 0, %s43
      %s55 = sphi 0, %s57
      %s58 = sphi 0, %s55
      %s59 = sphi 0, %s58
      %s75 = sphi 0, %s59
      %s79 = sphi 0, %s79
      %s81 = sphi 0, %s79
      %s82 = sphi 0, %s81
      %s96 = sphi 0, %s82
      %s100 = sphi 0, %s100
      %s102 = sphi 0, %s100
      %s103 = sphi 0, %s102
      %s117 = sphi 0, %s103
      %s121 = sphi 0, %s121
      %s123 = sphi 0, %s121
      %s124 = sphi 0, %s123
      %s138 = sphi 0, %s124
      %s142 = sphi 0, %s142
      %s144 = sphi 0, %s142
      %s145 = sphi 0, %s144
      %s159 = sphi 0, %s145
      %s163 = sphi 0, %s163
      %s165 = sphi 0, %s163
      %s166 = sphi 0, %s165
      %s180 = sphi 0, %s166
      %s184 = sphi 0, %s184
      %s186 = sphi 0, %s184
      %s187 = sphi 0, %s186
      %s201 = sphi 0, %s187
      %s205 = sphi 0, %s205
      %s207 = sphi 0, %s205
      %s208 = sphi 0, %s207
      %s222 = sphi 0, %s208
      %s226 = sphi 0, %s226
      %s228 = sphi 0, %s226
      %s229 = sphi 0, %s228
      %s243 = sphi 0, %s229
      %s247 = sphi 0, %s247
      %s249 = sphi 0, %s247
      %s250 = sphi 0, %s249
      %s264 = sphi 0, %s250
      %s268 = sphi 0, %s268
      %s270 = sphi 0, %s268
      %s271 = sphi 0, %s270
      %s285 = sphi 0, %s271
      %s289 = sphi 0, %s289
      %s291 = sphi 0, %s289
      %s292 = sphi 0, %s291
      %s306 = sphi 0, %s292
      %s310 = sphi 0, %s310
      %s312 = sphi 0, %s310
      %s313 = sphi 0, %s312
      %s327 = sphi 0, %s313
      %s331 = sphi 0, %s331
      %s333 = sphi 0, %s331
      %s334 = sphi 0, %s333
      %s348 = sphi 0, %s334
      %s352 = sphi 0, %s352
      %s354 = sphi 0, %s352
      %s355 = sphi 0, %s354
      %s369 = sphi 0, %s355
      %s377 = sphi 0, %s379
      %s380 = sphi 0, %s377
      %s381 = sphi 0, %s380
      %s397 = sphi 0, %s381
      %s405 = sphi 0, %s407
      %s408 = sphi 0, %s405
      %s409 = sphi 0, %s408
      %s425 = sphi 0, %s409
    $region4: #{tpu_custom_call.1} parent=1 // loop_header_branch
      %36 = sbr.rel (%p34) target = $region8
    $region5: #{tpu_custom_call.1} parent=1 // loop_body
      %s38 = ssub.s32 %s33, 1
      %s39 = ssub.s32 %s33, 2
      %s46 = sadd.s32 1, %s41
      %p47 = scmp.ge.s32.totalorder %s46, 1
      %s48 = scalar_select %p47, 0, %s46
      %s49 = sadd.s32 1, %s40
      %s50 = scalar_select %p47, %s49, %s40
      %p51 = scmp.ge.s32.totalorder %s50, 2
      %s52 = scalar_select %p51, 0, %s50
      %s53 = ssub.s32 %s40, %s52
      %p54 = scmp.eq.s32.totalorder %s53, 0
      %s56 = sadd.s32 %s55, 1
      %s57 = scalar_select %p54, %s55, %s56
      %p60 = pneg %p54
      %p61 = scmp.eq.s32.totalorder %s33, 1
      %p62 = por %p60, %p61
      %p63 = scmp.ne.s32.totalorder %s55, %s58
      %p64 = scmp.eq.s32.totalorder %s33, 0
      %p65 = por %p63, %p64
      %p66 = scmp.ne.s32.totalorder %s55, %s58
      %p67 = scmp.eq.s32.totalorder %s38, 1
      %p68 = por %p66, %p67
      %p69 = scmp.ne.s32.totalorder %s58, %s59
      %p70 = scmp.eq.s32.totalorder %s38, 0
      %p71 = por %p69, %p70
      %p72 = scmp.ne.s32.totalorder %s58, %s59
      %p73 = scmp.eq.s32.totalorder %s39, 1
      %p74 = por %p72, %p73
      %p76 = scmp.ne.s32.totalorder %s59, %s75
      %p77 = scmp.eq.s32.totalorder %s39, 0
      %p78 = por %p76, %p77
      %s80 = sadd.s32 %s79, 1
      %p83 = scmp.eq.s32.totalorder %s33, 1
      %p84 = scmp.ne.s32.totalorder %s79, %s81
      %p85 = scmp.eq.s32.totalorder %s33, 0
      %p86 = por %p84, %p85
      %p87 = scmp.ne.s32.totalorder %s79, %s81
      %p88 = scmp.eq.s32.totalorder %s38, 1
      %p89 = por %p87, %p88
      %p90 = scmp.ne.s32.totalorder %s81, %s82
      %p91 = scmp.eq.s32.totalorder %s38, 0
      %p92 = por %p90, %p91
      %p93 = scmp.ne.s32.totalorder %s81, %s82
      %p94 = scmp.eq.s32.totalorder %s39, 1
      %p95 = por %p93, %p94
      %p97 = scmp.ne.s32.totalorder %s82, %s96
      %p98 = scmp.eq.s32.totalorder %s39, 0
      %p99 = por %p97, %p98
      %s101 = sadd.s32 %s100, 1
      %p104 = scmp.eq.s32.totalorder %s33, 1
      %p105 = scmp.ne.s32.totalorder %s100, %s102
      %p106 = scmp.eq.s32.totalorder %s33, 0
      %p107 = por %p105, %p106
      %p108 = scmp.ne.s32.totalorder %s100, %s102
      %p109 = scmp.eq.s32.totalorder %s38, 1
      %p110 = por %p108, %p109
      %p111 = scmp.ne.s32.totalorder %s102, %s103
      %p112 = scmp.eq.s32.totalorder %s38, 0
      %p113 = por %p111, %p112
      %p114 = scmp.ne.s32.totalorder %s102, %s103
      %p115 = scmp.eq.s32.totalorder %s39, 1
      %p116 = por %p114, %p115
      %p118 = scmp.ne.s32.totalorder %s103, %s117
      %p119 = scmp.eq.s32.totalorder %s39, 0
      %p120 = por %p118, %p119
      %s122 = sadd.s32 %s121, 1
      %p125 = scmp.eq.s32.totalorder %s33, 1
      %p126 = scmp.ne.s32.totalorder %s121, %s123
      %p127 = scmp.eq.s32.totalorder %s33, 0
      %p128 = por %p126, %p127
      %p129 = scmp.ne.s32.totalorder %s121, %s123
      %p130 = scmp.eq.s32.totalorder %s38, 1
      %p131 = por %p129, %p130
      %p132 = scmp.ne.s32.totalorder %s123, %s124
      %p133 = scmp.eq.s32.totalorder %s38, 0
      %p134 = por %p132, %p133
      %p135 = scmp.ne.s32.totalorder %s123, %s124
      %p136 = scmp.eq.s32.totalorder %s39, 1
      %p137 = por %p135, %p136
      %p139 = scmp.ne.s32.totalorder %s124, %s138
      %p140 = scmp.eq.s32.totalorder %s39, 0
      %p141 = por %p139, %p140
      %s143 = sadd.s32 %s142, 1
      %p146 = scmp.eq.s32.totalorder %s33, 1
      %p147 = scmp.ne.s32.totalorder %s142, %s144
      %p148 = scmp.eq.s32.totalorder %s33, 0
      %p149 = por %p147, %p148
      %p150 = scmp.ne.s32.totalorder %s142, %s144
      %p151 = scmp.eq.s32.totalorder %s38, 1
      %p152 = por %p150, %p151
      %p153 = scmp.ne.s32.totalorder %s144, %s145
      %p154 = scmp.eq.s32.totalorder %s38, 0
      %p155 = por %p153, %p154
      %p156 = scmp.ne.s32.totalorder %s144, %s145
      %p157 = scmp.eq.s32.totalorder %s39, 1
      %p158 = por %p156, %p157
      %p160 = scmp.ne.s32.totalorder %s145, %s159
      %p161 = scmp.eq.s32.totalorder %s39, 0
      %p162 = por %p160, %p161
      %s164 = sadd.s32 %s163, 1
      %p167 = scmp.eq.s32.totalorder %s33, 1
      %p168 = scmp.ne.s32.totalorder %s163, %s165
      %p169 = scmp.eq.s32.totalorder %s33, 0
      %p170 = por %p168, %p169
      %p171 = scmp.ne.s32.totalorder %s163, %s165
      %p172 = scmp.eq.s32.totalorder %s38, 1
      %p173 = por %p171, %p172
      %p174 = scmp.ne.s32.totalorder %s165, %s166
      %p175 = scmp.eq.s32.totalorder %s38, 0
      %p176 = por %p174, %p175
      %p177 = scmp.ne.s32.totalorder %s165, %s166
      %p178 = scmp.eq.s32.totalorder %s39, 1
      %p179 = por %p177, %p178
      %p181 = scmp.ne.s32.totalorder %s166, %s180
      %p182 = scmp.eq.s32.totalorder %s39, 0
      %p183 = por %p181, %p182
      %s185 = sadd.s32 %s184, 1
      %p188 = scmp.eq.s32.totalorder %s33, 1
      %p189 = scmp.ne.s32.totalorder %s184, %s186
      %p190 = scmp.eq.s32.totalorder %s33, 0
      %p191 = por %p189, %p190
      %p192 = scmp.ne.s32.totalorder %s184, %s186
      %p193 = scmp.eq.s32.totalorder %s38, 1
      %p194 = por %p192, %p193
      %p195 = scmp.ne.s32.totalorder %s186, %s187
      %p196 = scmp.eq.s32.totalorder %s38, 0
      %p197 = por %p195, %p196
      %p198 = scmp.ne.s32.totalorder %s186, %s187
      %p199 = scmp.eq.s32.totalorder %s39, 1
      %p200 = por %p198, %p199
      %p202 = scmp.ne.s32.totalorder %s187, %s201
      %p203 = scmp.eq.s32.totalorder %s39, 0
      %p204 = por %p202, %p203
      %s206 = sadd.s32 %s205, 1
      %p209 = scmp.eq.s32.totalorder %s33, 1
      %p210 = scmp.ne.s32.totalorder %s205, %s207
      %p211 = scmp.eq.s32.totalorder %s33, 0
      %p212 = por %p210, %p211
      %p213 = scmp.ne.s32.totalorder %s205, %s207
      %p214 = scmp.eq.s32.totalorder %s38, 1
      %p215 = por %p213, %p214
      %p216 = scmp.ne.s32.totalorder %s207, %s208
      %p217 = scmp.eq.s32.totalorder %s38, 0
      %p218 = por %p216, %p217
      %p219 = scmp.ne.s32.totalorder %s207, %s208
      %p220 = scmp.eq.s32.totalorder %s39, 1
      %p221 = por %p219, %p220
      %p223 = scmp.ne.s32.totalorder %s208, %s222
      %p224 = scmp.eq.s32.totalorder %s39, 0
      %p225 = por %p223, %p224
      %s227 = sadd.s32 %s226, 1
      %p230 = scmp.eq.s32.totalorder %s33, 1
      %p231 = scmp.ne.s32.totalorder %s226, %s228
      %p232 = scmp.eq.s32.totalorder %s33, 0
      %p233 = por %p231, %p232
      %p234 = scmp.ne.s32.totalorder %s226, %s228
      %p235 = scmp.eq.s32.totalorder %s38, 1
      %p236 = por %p234, %p235
      %p237 = scmp.ne.s32.totalorder %s228, %s229
      %p238 = scmp.eq.s32.totalorder %s38, 0
      %p239 = por %p237, %p238
      %p240 = scmp.ne.s32.totalorder %s228, %s229
      %p241 = scmp.eq.s32.totalorder %s39, 1
      %p242 = por %p240, %p241
      %p244 = scmp.ne.s32.totalorder %s229, %s243
      %p245 = scmp.eq.s32.totalorder %s39, 0
      %p246 = por %p244, %p245
      %s248 = sadd.s32 %s247, 1
      %p251 = scmp.eq.s32.totalorder %s33, 1
      %p252 = scmp.ne.s32.totalorder %s247, %s249
      %p253 = scmp.eq.s32.totalorder %s33, 0
      %p254 = por %p252, %p253
      %p255 = scmp.ne.s32.totalorder %s247, %s249
      %p256 = scmp.eq.s32.totalorder %s38, 1
      %p257 = por %p255, %p256
      %p258 = scmp.ne.s32.totalorder %s249, %s250
      %p259 = scmp.eq.s32.totalorder %s38, 0
      %p260 = por %p258, %p259
      %p261 = scmp.ne.s32.totalorder %s249, %s250
      %p262 = scmp.eq.s32.totalorder %s39, 1
      %p263 = por %p261, %p262
      %p265 = scmp.ne.s32.totalorder %s250, %s264
      %p266 = scmp.eq.s32.totalorder %s39, 0
      %p267 = por %p265, %p266
      %s269 = sadd.s32 %s268, 1
      %p272 = scmp.eq.s32.totalorder %s33, 1
      %p273 = scmp.ne.s32.totalorder %s268, %s270
      %p274 = scmp.eq.s32.totalorder %s33, 0
      %p275 = por %p273, %p274
      %p276 = scmp.ne.s32.totalorder %s268, %s270
      %p277 = scmp.eq.s32.totalorder %s38, 1
      %p278 = por %p276, %p277
      %p279 = scmp.ne.s32.totalorder %s270, %s271
      %p280 = scmp.eq.s32.totalorder %s38, 0
      %p281 = por %p279, %p280
      %p282 = scmp.ne.s32.totalorder %s270, %s271
      %p283 = scmp.eq.s32.totalorder %s39, 1
      %p284 = por %p282, %p283
      %p286 = scmp.ne.s32.totalorder %s271, %s285
      %p287 = scmp.eq.s32.totalorder %s39, 0
      %p288 = por %p286, %p287
      %s290 = sadd.s32 %s289, 1
      %p293 = scmp.eq.s32.totalorder %s33, 1
      %p294 = scmp.ne.s32.totalorder %s289, %s291
      %p295 = scmp.eq.s32.totalorder %s33, 0
      %p296 = por %p294, %p295
      %p297 = scmp.ne.s32.totalorder %s289, %s291
      %p298 = scmp.eq.s32.totalorder %s38, 1
      %p299 = por %p297, %p298
      %p300 = scmp.ne.s32.totalorder %s291, %s292
      %p301 = scmp.eq.s32.totalorder %s38, 0
      %p302 = por %p300, %p301
      %p303 = scmp.ne.s32.totalorder %s291, %s292
      %p304 = scmp.eq.s32.totalorder %s39, 1
      %p305 = por %p303, %p304
      %p307 = scmp.ne.s32.totalorder %s292, %s306
      %p308 = scmp.eq.s32.totalorder %s39, 0
      %p309 = por %p307, %p308
      %s311 = sadd.s32 %s310, 1
      %p314 = scmp.eq.s32.totalorder %s33, 1
      %p315 = scmp.ne.s32.totalorder %s310, %s312
      %p316 = scmp.eq.s32.totalorder %s33, 0
      %p317 = por %p315, %p316
      %p318 = scmp.ne.s32.totalorder %s310, %s312
      %p319 = scmp.eq.s32.totalorder %s38, 1
      %p320 = por %p318, %p319
      %p321 = scmp.ne.s32.totalorder %s312, %s313
      %p322 = scmp.eq.s32.totalorder %s38, 0
      %p323 = por %p321, %p322
      %p324 = scmp.ne.s32.totalorder %s312, %s313
      %p325 = scmp.eq.s32.totalorder %s39, 1
      %p326 = por %p324, %p325
      %p328 = scmp.ne.s32.totalorder %s313, %s327
      %p329 = scmp.eq.s32.totalorder %s39, 0
      %p330 = por %p328, %p329
      %s332 = sadd.s32 %s331, 1
      %p335 = scmp.eq.s32.totalorder %s33, 1
      %p336 = scmp.ne.s32.totalorder %s331, %s333
      %p337 = scmp.eq.s32.totalorder %s33, 0
      %p338 = por %p336, %p337
      %p339 = scmp.ne.s32.totalorder %s331, %s333
      %p340 = scmp.eq.s32.totalorder %s38, 1
      %p341 = por %p339, %p340
      %p342 = scmp.ne.s32.totalorder %s333, %s334
      %p343 = scmp.eq.s32.totalorder %s38, 0
      %p344 = por %p342, %p343
      %p345 = scmp.ne.s32.totalorder %s333, %s334
      %p346 = scmp.eq.s32.totalorder %s39, 1
      %p347 = por %p345, %p346
      %p349 = scmp.ne.s32.totalorder %s334, %s348
      %p350 = scmp.eq.s32.totalorder %s39, 0
      %p351 = por %p349, %p350
      %s353 = sadd.s32 %s352, 1
      %p356 = scmp.eq.s32.totalorder %s33, 1
      %p357 = scmp.ne.s32.totalorder %s352, %s354
      %p358 = scmp.eq.s32.totalorder %s33, 0
      %p359 = por %p357, %p358
      %p360 = scmp.ne.s32.totalorder %s352, %s354
      %p361 = scmp.eq.s32.totalorder %s38, 1
      %p362 = por %p360, %p361
      %p363 = scmp.ne.s32.totalorder %s354, %s355
      %p364 = scmp.eq.s32.totalorder %s38, 0
      %p365 = por %p363, %p364
      %p366 = scmp.ne.s32.totalorder %s354, %s355
      %p367 = scmp.eq.s32.totalorder %s39, 1
      %p368 = por %p366, %p367
      %p370 = scmp.ne.s32.totalorder %s355, %s369
      %p371 = scmp.eq.s32.totalorder %s39, 0
      %p372 = por %p370, %p371
      %s373 = ssub.s32 %s40, %s52
      %s374 = ssub.s32 %s41, %s48
      %s375 = sor.u32 %s373, %s374
      %p376 = scmp.eq.s32.totalorder %s375, 0
      %s378 = sadd.s32 %s377, 1
      %s379 = scalar_select %p376, %s377, %s378
      %p382 = pneg %p376
      %p383 = scmp.eq.s32.totalorder %s33, 1
      %p384 = por %p382, %p383
      %p385 = scmp.ne.s32.totalorder %s377, %s380
      %p386 = scmp.eq.s32.totalorder %s33, 0
      %p387 = por %p385, %p386
      %p388 = scmp.ne.s32.totalorder %s377, %s380
      %p389 = scmp.eq.s32.totalorder %s38, 1
      %p390 = por %p388, %p389
      %p391 = scmp.ne.s32.totalorder %s380, %s381
      %p392 = scmp.eq.s32.totalorder %s38, 0
      %p393 = por %p391, %p392
      %p394 = scmp.ne.s32.totalorder %s380, %s381
      %p395 = scmp.eq.s32.totalorder %s39, 1
      %p396 = por %p394, %p395
      %p398 = scmp.ne.s32.totalorder %s381, %s397
      %p399 = scmp.eq.s32.totalorder %s39, 0
      %p400 = por %p398, %p399
      %s401 = ssub.s32 %s40, %s52
      %s402 = ssub.s32 %s41, %s48
      %s403 = sor.u32 %s401, %s402
      %p404 = scmp.eq.s32.totalorder %s403, 0
      %s406 = sadd.s32 %s405, 1
      %s407 = scalar_select %p404, %s405, %s406
      %p410 = pneg %p404
      %p411 = scmp.eq.s32.totalorder %s33, 1
      %p412 = por %p410, %p411
      %p413 = scmp.ne.s32.totalorder %s405, %s408
      %p414 = scmp.eq.s32.totalorder %s33, 0
      %p415 = por %p413, %p414
      %p416 = scmp.ne.s32.totalorder %s405, %s408
      %p417 = scmp.eq.s32.totalorder %s38, 1
      %p418 = por %p416, %p417
      %p419 = scmp.ne.s32.totalorder %s408, %s409
      %p420 = scmp.eq.s32.totalorder %s38, 0
      %p421 = por %p419, %p420
      %p422 = scmp.ne.s32.totalorder %s408, %s409
      %p423 = scmp.eq.s32.totalorder %s39, 1
      %p424 = por %p422, %p423
      %p426 = scmp.ne.s32.totalorder %s409, %s425
      %p427 = scmp.eq.s32.totalorder %s39, 0
      %p428 = por %p426, %p427
      %p429 = scmp.le.s32.totalorder 1, %s33
      %p430 = scmp.lt.s32.totalorder %s33, 3
      %p431 = pnand %p429, %p430
      %p432 = pneg %p431
      // Predicated region
      $region9: #{tpu_custom_call.1} parent=5 // pred_check
        _
      $region10: #{tpu_custom_call.1} parent=5 // pred_check_branch
        %434 = sbr.rel (%p431) target = $region12
      $region11: #{tpu_custom_call.1} parent=5 // pred_region
        %s435 = ssub.s32 %s33, 1
        // Predicated region
        $region13: #{tpu_custom_call.1} parent=11 // pred_check
          %p436 = pneg %p92
        $region14: #{tpu_custom_call.1} parent=11 // pred_check_branch
          %438 = sbr.rel (%p436) target = $region16
        $region15: #{tpu_custom_call.1} parent=11 // pred_region
          _
        $region16: #{tpu_custom_call.1} parent=11 // pred_fallthru
          _
        // Predicated region
        $region17: #{tpu_custom_call.1} parent=11 // pred_check
          %p439 = pneg %p113
        $region18: #{tpu_custom_call.1} parent=11 // pred_check_branch
          %441 = sbr.rel (%p439) target = $region20
        $region19: #{tpu_custom_call.1} parent=11 // pred_region
          _
        $region20: #{tpu_custom_call.1} parent=11 // pred_fallthru
          _
        // Predicated region
        $region21: #{tpu_custom_call.1} parent=11 // pred_check
          %p442 = pneg %p134
        $region22: #{tpu_custom_call.1} parent=11 // pred_check_branch
          %444 = sbr.rel (%p442) target = $region24
        $region23: #{tpu_custom_call.1} parent=11 // pred_region
          _
        $region24: #{tpu_custom_call.1} parent=11 // pred_fallthru
          _
        // Predicated region
        $region25: #{tpu_custom_call.1} parent=11 // pred_check
          %p445 = pneg %p155
        $region26: #{tpu_custom_call.1} parent=11 // pred_check_branch
          %447 = sbr.rel (%p445) target = $region28
        $region27: #{tpu_custom_call.1} parent=11 // pred_region
          _
        $region28: #{tpu_custom_call.1} parent=11 // pred_fallthru
          _
        // Predicated region
        $region29: #{tpu_custom_call.1} parent=11 // pred_check
          %p448 = pneg %p176
        $region30: #{tpu_custom_call.1} parent=11 // pred_check_branch
          %450 = sbr.rel (%p448) target = $region32
        $region31: #{tpu_custom_call.1} parent=11 // pred_region
          _
        $region32: #{tpu_custom_call.1} parent=11 // pred_fallthru
          _
        // Predicated region
        $region33: #{tpu_custom_call.1} parent=11 // pred_check
          %p451 = pneg %p197
        $region34: #{tpu_custom_call.1} parent=11 // pred_check_branch
          %453 = sbr.rel (%p451) target = $region36
        $region35: #{tpu_custom_call.1} parent=11 // pred_region
          _
        $region36: #{tpu_custom_call.1} parent=11 // pred_fallthru
          _
        // Predicated region
        $region37: #{tpu_custom_call.1} parent=11 // pred_check
          %p454 = pneg %p218
        $region38: #{tpu_custom_call.1} parent=11 // pred_check_branch
          %456 = sbr.rel (%p454) target = $region40
        $region39: #{tpu_custom_call.1} parent=11 // pred_region
          _
        $region40: #{tpu_custom_call.1} parent=11 // pred_fallthru
          _
        // Predicated region
        $region41: #{tpu_custom_call.1} parent=11 // pred_check
          %p457 = pneg %p239
        $region42: #{tpu_custom_call.1} parent=11 // pred_check_branch
          %459 = sbr.rel (%p457) target = $region44
        $region43: #{tpu_custom_call.1} parent=11 // pred_region
          _
        $region44: #{tpu_custom_call.1} parent=11 // pred_fallthru
          _
        // Predicated region
        $region45: #{tpu_custom_call.1} parent=11 // pred_check
          %p460 = pneg %p260
        $region46: #{tpu_custom_call.1} parent=11 // pred_check_branch
          %462 = sbr.rel (%p460) target = $region48
        $region47: #{tpu_custom_call.1} parent=11 // pred_region
          %s464 = ssub.s32 512, 512
          %465 = vsyncadd [#allocation8], %s464
          %s466 = sshll.u32 [#allocation7], 4
          %s467 = int_to_ptr.vmem [resolvable:$true] %s466
          %472 = dma.hbm_to_vmem [thread:$0]  %s9, 512, %s467, [#allocation8], 128, 128, 8
        $region48: #{tpu_custom_call.1} parent=11 // pred_fallthru
          _
        // Predicated region
        $region49: #{tpu_custom_call.1} parent=11 // pred_check
          %p473 = pneg %p281
        $region50: #{tpu_custom_call.1} parent=11 // pred_check_branch
          %475 = sbr.rel (%p473) target = $region52
        $region51: #{tpu_custom_call.1} parent=11 // pred_region
          _
        $region52: #{tpu_custom_call.1} parent=11 // pred_fallthru
          _
        // Predicated region
        $region53: #{tpu_custom_call.1} parent=11 // pred_check
          %p476 = pneg %p302
        $region54: #{tpu_custom_call.1} parent=11 // pred_check_branch
          %478 = sbr.rel (%p476) target = $region56
        $region55: #{tpu_custom_call.1} parent=11 // pred_region
          _
        $region56: #{tpu_custom_call.1} parent=11 // pred_fallthru
          _
        // Predicated region
        $region57: #{tpu_custom_call.1} parent=11 // pred_check
          %p479 = pneg %p323
        $region58: #{tpu_custom_call.1} parent=11 // pred_check_branch
          %481 = sbr.rel (%p479) target = $region60
        $region59: #{tpu_custom_call.1} parent=11 // pred_region
          _
        $region60: #{tpu_custom_call.1} parent=11 // pred_fallthru
          _
        // Predicated region
        $region61: #{tpu_custom_call.1} parent=11 // pred_check
          %p482 = pneg %p344
        $region62: #{tpu_custom_call.1} parent=11 // pred_check_branch
          %484 = sbr.rel (%p482) target = $region64
        $region63: #{tpu_custom_call.1} parent=11 // pred_region
          _
        $region64: #{tpu_custom_call.1} parent=11 // pred_fallthru
          _
        // Predicated region
        $region65: #{tpu_custom_call.1} parent=11 // pred_check
          %p485 = pneg %p365
        $region66: #{tpu_custom_call.1} parent=11 // pred_check_branch
          %487 = sbr.rel (%p485) target = $region68
        $region67: #{tpu_custom_call.1} parent=11 // pred_region
          _
        $region68: #{tpu_custom_call.1} parent=11 // pred_fallthru
          _
      $region12: #{tpu_custom_call.1} parent=5 // pred_fallthru
        _
      %p488 = scmp.lt.s32.totalorder %s33, 2
      // Predicated region
      $region69: #{tpu_custom_call.1} parent=5 // pred_check
        %p489 = pneg %p488
      $region70: #{tpu_custom_call.1} parent=5 // pred_check_branch
        %491 = sbr.rel (%p489) target = $region72
      $region71: #{tpu_custom_call.1} parent=5 // pred_region
        // Predicated region
        $region73: #{tpu_custom_call.1} parent=71 // pred_check
          %p492 = pneg %p65
        $region74: #{tpu_custom_call.1} parent=71 // pred_check_branch
          %494 = sbr.rel (%p492) target = $region76
        $region75: #{tpu_custom_call.1} parent=71 // pred_region
          %s495 = sand.u32 %s55, 1
          %s496 = scalar_lea.sflag [#allocation5], %s495
          %s497 = sand.u32 %s55, 1
          %s498 = smul.addr %s497, 8
          %s499 = scalar_lea.vmem [#allocation4], %s498
          %s501 = ssub.s32 128, 128
          %502 = vsyncadd %s496, %s501
          %s503 = smul.addr %s40, 128
          %s504 = scalar_lea.hbm %s0, %s503
          %s506 = sshll.u32 %s499, 4
          %s507 = int_to_ptr.vmem [resolvable:$true] %s506
          %509 = dma.hbm_to_vmem [thread:$0]  %s504, 128, %s507, %s496
        $region76: #{tpu_custom_call.1} parent=71 // pred_fallthru
          _
      $region72: #{tpu_custom_call.1} parent=5 // pred_fallthru
        _
      %p510 = scmp.le.s32.totalorder 1, %s33
      %p511 = scmp.lt.s32.totalorder %s33, 3
      %p512 = pnand %p510, %p511
      %p513 = pneg %p512
      // Predicated region
      $region77: #{tpu_custom_call.1} parent=5 // pred_check
        _
      $region78: #{tpu_custom_call.1} parent=5 // pred_check_branch
        %515 = sbr.rel (%p512) target = $region80
      $region79: #{tpu_custom_call.1} parent=5 // pred_region
        %s516 = ssub.s32 %s33, 1
        %s517 = sand.u32 %s58, 1
        %s518 = scalar_lea.sflag [#allocation5], %s517
        %s519 = sand.u32 %s58, 1
        %s520 = smul.addr %s519, 8
        %s521 = scalar_lea.vmem [#allocation4], %s520
        // Predicated region
        $region81: #{tpu_custom_call.1} parent=79 // pred_check
          %p522 = pneg %p71
        $region82: #{tpu_custom_call.1} parent=79 // pred_check_branch
          %524 = sbr.rel (%p522) target = $region84
        $region83: #{tpu_custom_call.1} parent=79 // pred_region
          %525 = dma.done %s518, 128
        $region84: #{tpu_custom_call.1} parent=79 // pred_fallthru
          _
        // Predicated region
        $region85: #{tpu_custom_call.1} parent=79 // pred_check
          %p526 = pneg %p260
        $region86: #{tpu_custom_call.1} parent=79 // pred_check_branch
          %528 = sbr.rel (%p526) target = $region88
        $region87: #{tpu_custom_call.1} parent=79 // pred_region
          %529 = dma.done [#allocation8], 512
        $region88: #{tpu_custom_call.1} parent=79 // pred_fallthru
          _
        %s530 = sand.u32 %s58, 1
        %s531 = scalar_lea.sflag [#allocation5], %s530
        %s532 = sand.u32 %s58, 1
        %s533 = smul.addr %s532, 8
        %s534 = scalar_lea.vmem [#allocation4], %s533
        %p535 = pneg %p71
        %p536 = pneg %p68
        %p537 = pneg %p92
        %p538 = pneg %p89
        %p539 = pneg %p113
        %p540 = pneg %p110
        %p541 = pneg %p134
        %p542 = pneg %p131
        %p543 = pneg %p155
        %p544 = pneg %p152
        %p545 = pneg %p176
        %p546 = pneg %p173
        %p547 = pneg %p197
        %p548 = pneg %p194
        %p549 = pneg %p218
        %p550 = pneg %p215
        %p551 = pneg %p239
        %p552 = pneg %p236
        %p553 = pneg %p260
        %p554 = pneg %p257
        %p555 = pneg %p281
        %p556 = pneg %p278
        %p557 = pneg %p302
        %p558 = pneg %p299
        %p559 = pneg %p323
        %p560 = pneg %p320
        %p561 = pneg %p344
        %p562 = pneg %p341
        %p563 = pneg %p365
        %p564 = pneg %p362
        %p565 = pneg %p393
        %p566 = pneg %p390
        %s567 = sand.u32 %s380, 1
        %s568 = scalar_lea.sflag [#allocation6], %s567
        %s569 = sand.u32 %s380, 1
        %s570 = smul.addr %s569, 8
        %s571 = scalar_lea.vmem [#allocation9], %s570
        %p572 = pneg %p421
        %p573 = pneg %p418
        %s574 = sand.u32 %s408, 1
        %s575 = scalar_lea.sflag [#allocation11], %s574
        %s576 = sand.u32 %s408, 1
        %s577 = smul.addr %s576, 8
        %s578 = scalar_lea.vmem [#allocation10], %s577
        %p579 = scmp.eq.s32.totalorder %s43, 0
        // Predicated region
        $region89: #{tpu_custom_call.1} parent=79 // pred_check
          %p580 = pneg %p579
        $region90: #{tpu_custom_call.1} parent=79 // pred_check_branch
          %582 = sbr.rel (%p580) target = $region92
        $region91: #{tpu_custom_call.1} parent=79 // pred_region
          %v583 = vld [vmem:[%s521] sm:$0xff]
          %v584 = vld [vmem:[%s2] sm:$0xff]
          %v585 = vld [vmem:[%s2 + $0x8] sm:$0xff]
          %v586 = vld [vmem:[%s2 + $0x10] sm:$0xff]
          %v587 = vld [vmem:[%s2 + $0x18] sm:$0xff]
          %v588 = vld [vmem:[%s4] sm:$0x1]
          %v590 = vlaneseq
          %v591 = vshrl.u32 %v590, 7
          %v592 = vsub.s32 0, %v591
          %v593 = vrot.slane %v588, %v592
          %vm595 = vcmask 261120
          %v597 = vsel %vm595, %v583, 0
          %599 = vmatprep.subr.mxu0 0.0
          %600 = vmatpush1.msra.mxu0 %v584
          %601 = vmatprep.subr.mxu0 0.0
          %602 = vmatpush1.msra.mxu0 %v585
          %603 = vmatprep.subr.mxu0 0.0
          %604 = vmatpush1.msra.mxu0 %v586
          %605 = vmatprep.subr.mxu0 0.0
          %606 = vmatpush1.msra.mxu0 %v587
          %607 = vmatprep.subr.mxu0 0.0
          %608 = vmatpush1.msra.mxu0 0.0
          %609 = vmatprep.subr.mxu0 0.0
          %610 = vmatpush1.msra.mxu0 0.0
          %611 = vmatprep.subr.mxu0 0.0
          %612 = vmatpush1.msra.mxu0 0.0
          %613 = vmatprep.subr.mxu0 0.0
          %614 = vmatpush1.msra.mxu0 0.0
          %615 = vmatprep.subr.mxu0 0.0
          %616 = vmatpush1.msra.mxu0 0.0
          %617 = vmatprep.subr.mxu0 0.0
          %618 = vmatpush1.msra.mxu0 0.0
          %619 = vmatprep.subr.mxu0 0.0
          %620 = vmatpush1.msra.mxu0 0.0
          %621 = vmatprep.subr.mxu0 0.0
          %622 = vmatpush1.msra.mxu0 0.0
          %623 = vmatprep.subr.mxu0 0.0
          %624 = vmatpush1.msra.mxu0 0.0
          %625 = vmatprep.subr.mxu0 0.0
          %626 = vmatpush1.msra.mxu0 0.0
          %627 = vmatprep.subr.mxu0 0.0
          %628 = vmatpush1.msra.mxu0 0.0
          %629 = vmatprep.subr.mxu0 0.0
          %630 = vmatpush1.msra.mxu0 0.0
          %631 = vmatprep.subr.mxu0 0.0
          %632 = vmatpush1.msra.mxu0 0.0
          %633 = vmatprep.subr.mxu0 0.0
          %634 = vmatpush1.msra.mxu0 0.0
          %635 = vmatprep.subr.mxu0 0.0
          %636 = vmatpush1.msra.mxu0 0.0
          %637 = vmatprep.subr.mxu0 0.0
          %638 = vmatpush1.msra.mxu0 0.0
          %639 = vmatprep.subr.mxu0 0.0
          %640 = vmatpush1.msra.mxu0 0.0
          %641 = vmatprep.subr.mxu0 0.0
          %642 = vmatpush1.msra.mxu0 0.0
          %643 = vmatprep.subr.mxu0 0.0
          %644 = vmatpush1.msra.mxu0 0.0
          %645 = vmatprep.subr.mxu0 0.0
          %646 = vmatpush1.msra.mxu0 0.0
          %647 = vmatprep.subr.mxu0 0.0
          %648 = vmatpush1.msra.mxu0 0.0
          %649 = vmatprep.subr.mxu0 0.0
          %650 = vmatpush1.msra.mxu0 0.0
          %651 = vmatprep.subr.mxu0 0.0
          %652 = vmatpush1.msra.mxu0 0.0
          %653 = vmatprep.subr.mxu0 0.0
          %654 = vmatpush1.msra.mxu0 0.0
          %655 = vmatprep.subr.mxu0 0.0
          %656 = vmatpush1.msra.mxu0 0.0
          %657 = vmatprep.subr.mxu0 0.0
          %658 = vmatpush1.msra.mxu0 0.0
          %659 = vmatprep.subr.mxu0 0.0
          %660 = vmatpush1.msra.mxu0 0.0
          %661 = vmatprep.subr.mxu0 0.0
          %662 = vmatpush1.msra.mxu0 0.0
          %663 = vmatprep.mubr.f32.mxu0 0.0
          %664 = vmatmul.mubr.f32.gmra.mrb[0].mxu0 %v597
          %v665 = vpop.f32.mrb[0].mxu0
          %v666 = vadd.f32 %v593, %v665
          %v667 = vpop.f32.mrb[0].mxu0
          %668 = vdwg.mxu0
          %670 = vrot.lane.b32.xlu0 %v666, 120
          %v671 = vpop.permute.xlu0 %670
          %673 = vrot.lane.b32.xlu0 %v666, 112
          %v674 = vpop.permute.xlu0 %673
          %676 = vrot.lane.b32.xlu0 %v666, 104
          %v677 = vpop.permute.xlu0 %676
          %v679 = vcombine.low %v666, %v674
          %v680 = vcombine.high %v666, %v674
          %v682 = vunpack.c.l.s4 1983009808
          %v683 = vunpack.c.0.s8 %v682
          %v684 = vlaneseq
          %v685 = vshrl.u32 %v684, 7
          %v686 = vsub.s32 %v683, %v685
          %v687 = vrot.slane %v679, %v686
          %v689 = vunpack.c.l.s4 1983009808
          %v690 = vunpack.c.0.s8 %v689
          %v691 = vlaneseq
          %v692 = vshrl.u32 %v691, 7
          %v693 = vsub.s32 %v690, %v692
          %v694 = vrot.slane %v680, %v693
          %v695 = vcombine.low %v671, %v677
          %v696 = vcombine.high %v671, %v677
          %v698 = vunpack.c.l.s4 1983009808
          %v699 = vunpack.c.0.s8 %v698
          %v700 = vlaneseq
          %v701 = vshrl.u32 %v700, 7
          %v702 = vsub.s32 %v699, %v701
          %v703 = vrot.slane %v695, %v702
          %v705 = vunpack.c.l.s4 1983009808
          %v706 = vunpack.c.0.s8 %v705
          %v707 = vlaneseq
          %v708 = vshrl.u32 %v707, 7
          %v709 = vsub.s32 %v706, %v708
          %v710 = vrot.slane %v696, %v709
          %v711 = vcombine.low %v687, %v703
          %v712 = vcombine.high %v687, %v703
          %v714 = vunpack.c.l.s4 1934713408
          %v715 = vunpack.c.0.s8 %v714
          %v716 = vlaneseq
          %v717 = vshrl.u32 %v716, 7
          %v718 = vsub.s32 %v715, %v717
          %v719 = vrot.slane %v711, %v718
          %v721 = vunpack.c.l.s4 1934713408
          %v722 = vunpack.c.0.s8 %v721
          %v723 = vlaneseq
          %v724 = vshrl.u32 %v723, 7
          %v725 = vsub.s32 %v722, %v724
          %v726 = vrot.slane %v712, %v725
          %v727 = vcombine.low %v694, %v710
          %v728 = vcombine.high %v694, %v710
          %v730 = vunpack.c.l.s4 1934713408
          %v731 = vunpack.c.0.s8 %v730
          %v732 = vlaneseq
          %v733 = vshrl.u32 %v732, 7
          %v734 = vsub.s32 %v731, %v733
          %v735 = vrot.slane %v727, %v734
          %v737 = vunpack.c.l.s4 1934713408
          %v738 = vunpack.c.0.s8 %v737
          %v739 = vlaneseq
          %v740 = vshrl.u32 %v739, 7
          %v741 = vsub.s32 %v738, %v740
          %v742 = vrot.slane %v728, %v741
          %v743 = vcombine.high %v719, 0.0
          %v744 = vcombine.high %v726, 0.0
          %v745 = vcombine.high %v735, 0.0
          %v746 = vcombine.high %v742, 0.0
          %v747 = vcombine.low %v719, %v726
          %v749 = vunpack.c.l.s4 1983009808
          %v750 = vunpack.c.0.s8 %v749
          %v751 = vlaneseq
          %v752 = vshrl.u32 %v751, 7
          %v753 = vsub.s32 %v750, %v752
          %v754 = vrot.slane %v747, %v753
          %v755 = vcombine.low %v743, %v744
          %v757 = vunpack.c.l.s4 1983009808
          %v758 = vunpack.c.0.s8 %v757
          %v759 = vlaneseq
          %v760 = vshrl.u32 %v759, 7
          %v761 = vsub.s32 %v758, %v760
          %v762 = vrot.slane %v755, %v761
          %v763 = vcombine.low %v735, %v742
          %v765 = vunpack.c.l.s4 1983009808
          %v766 = vunpack.c.0.s8 %v765
          %v767 = vlaneseq
          %v768 = vshrl.u32 %v767, 7
          %v769 = vsub.s32 %v766, %v768
          %v770 = vrot.slane %v763, %v769
          %v771 = vcombine.low %v745, %v746
          %v773 = vunpack.c.l.s4 1983009808
          %v774 = vunpack.c.0.s8 %v773
          %v775 = vlaneseq
          %v776 = vshrl.u32 %v775, 7
          %v777 = vsub.s32 %v774, %v776
          %v778 = vrot.slane %v771, %v777
          %v779 = vcombine.low %v754, %v762
          %v780 = vcombine.high %v754, %v762
          %v782 = vunpack.c.l.s4 1934713408
          %v783 = vunpack.c.0.s8 %v782
          %v784 = vlaneseq
          %v785 = vshrl.u32 %v784, 7
          %v786 = vsub.s32 %v783, %v785
          %v787 = vrot.slane %v779, %v786
          %v789 = vunpack.c.l.s4 1934713408
          %v790 = vunpack.c.0.s8 %v789
          %v791 = vlaneseq
          %v792 = vshrl.u32 %v791, 7
          %v793 = vsub.s32 %v790, %v792
          %v794 = vrot.slane %v780, %v793
          %v795 = vcombine.low %v770, %v778
          %v796 = vcombine.high %v770, %v778
          %v798 = vunpack.c.l.s4 1934713408
          %v799 = vunpack.c.0.s8 %v798
          %v800 = vlaneseq
          %v801 = vshrl.u32 %v800, 7
          %v802 = vsub.s32 %v799, %v801
          %v803 = vrot.slane %v795, %v802
          %v805 = vunpack.c.l.s4 1934713408
          %v806 = vunpack.c.0.s8 %v805
          %v807 = vlaneseq
          %v808 = vshrl.u32 %v807, 7
          %v809 = vsub.s32 %v806, %v808
          %v810 = vrot.slane %v796, %v809
          %v811 = vcombine.low %v787, %v803
          %v812 = vcombine.high %v787, %v803
          %v813 = vcombine.low %v794, %v810
          %v814 = vcombine.high %v794, %v810
          %vm815 = vcmask 64512
          %816 = vst.msk [vmem:[#allocation2] sm:$0xff] %vm815, %v811
          %817 = vst.msk [vmem:[#allocation2 + $0x8] sm:$0xff] %vm815, %v812
          %818 = vst.msk [vmem:[#allocation2 + $0x10] sm:$0xff] %vm815, %v813
          %819 = vst.msk [vmem:[#allocation2 + $0x18] sm:$0xff] %vm815, %v814
          %820 = vrot.lane.b32.xlu0 %v666, 96
          %v821 = vpop.permute.xlu0 %820
          %822 = vrot.lane.b32.xlu0 %v671, 96
          %v823 = vpop.permute.xlu0 %822
          %824 = vrot.lane.b32.xlu0 %v674, 96
          %v825 = vpop.permute.xlu0 %824
          %826 = vrot.lane.b32.xlu0 %v677, 96
          %v827 = vpop.permute.xlu0 %826
          %v832 = vcombine.low %v821, %v825
          %v833 = vcombine.high %v821, %v825
          %v835 = vunpack.c.l.s4 1983009808
          %v836 = vunpack.c.0.s8 %v835
          %v837 = vlaneseq
          %v838 = vshrl.u32 %v837, 7
          %v839 = vsub.s32 %v836, %v838
          %v840 = vrot.slane %v832, %v839
          %v842 = vunpack.c.l.s4 1983009808
          %v843 = vunpack.c.0.s8 %v842
          %v844 = vlaneseq
          %v845 = vshrl.u32 %v844, 7
          %v846 = vsub.s32 %v843, %v845
          %v847 = vrot.slane %v833, %v846
          %v848 = vcombine.low %v823, %v827
          %v849 = vcombine.high %v823, %v827
          %v851 = vunpack.c.l.s4 1983009808
          %v852 = vunpack.c.0.s8 %v851
          %v853 = vlaneseq
          %v854 = vshrl.u32 %v853, 7
          %v855 = vsub.s32 %v852, %v854
          %v856 = vrot.slane %v848, %v855
          %v858 = vunpack.c.l.s4 1983009808
          %v859 = vunpack.c.0.s8 %v858
          %v860 = vlaneseq
          %v861 = vshrl.u32 %v860, 7
          %v862 = vsub.s32 %v859, %v861
          %v863 = vrot.slane %v849, %v862
          %v864 = vcombine.low %v840, %v856
          %v865 = vcombine.high %v840, %v856
          %v867 = vunpack.c.l.s4 1934713408
          %v868 = vunpack.c.0.s8 %v867
          %v869 = vlaneseq
          %v870 = vshrl.u32 %v869, 7
          %v871 = vsub.s32 %v868, %v870
          %v872 = vrot.slane %v864, %v871
          %v874 = vunpack.c.l.s4 1934713408
          %v875 = vunpack.c.0.s8 %v874
          %v876 = vlaneseq
          %v877 = vshrl.u32 %v876, 7
          %v878 = vsub.s32 %v875, %v877
          %v879 = vrot.slane %v865, %v878
          %v880 = vcombine.low %v847, %v863
          %v881 = vcombine.high %v847, %v863
          %v883 = vunpack.c.l.s4 1934713408
          %v884 = vunpack.c.0.s8 %v883
          %v885 = vlaneseq
          %v886 = vshrl.u32 %v885, 7
          %v887 = vsub.s32 %v884, %v886
          %v888 = vrot.slane %v880, %v887
          %v890 = vunpack.c.l.s4 1934713408
          %v891 = vunpack.c.0.s8 %v890
          %v892 = vlaneseq
          %v893 = vshrl.u32 %v892, 7
          %v894 = vsub.s32 %v891, %v893
          %v895 = vrot.slane %v881, %v894
          %v896 = vcombine.high %v872, 0.0
          %v897 = vcombine.high %v879, 0.0
          %v898 = vcombine.high %v888, 0.0
          %v899 = vcombine.high %v895, 0.0
          %v900 = vcombine.low %v872, %v879
          %v902 = vunpack.c.l.s4 1983009808
          %v903 = vunpack.c.0.s8 %v902
          %v904 = vlaneseq
          %v905 = vshrl.u32 %v904, 7
          %v906 = vsub.s32 %v903, %v905
          %v907 = vrot.slane %v900, %v906
          %v908 = vcombine.low %v896, %v897
          %v910 = vunpack.c.l.s4 1983009808
          %v911 = vunpack.c.0.s8 %v910
          %v912 = vlaneseq
          %v913 = vshrl.u32 %v912, 7
          %v914 = vsub.s32 %v911, %v913
          %v915 = vrot.slane %v908, %v914
          %v916 = vcombine.low %v888, %v895
          %v918 = vunpack.c.l.s4 1983009808
          %v919 = vunpack.c.0.s8 %v918
          %v920 = vlaneseq
          %v921 = vshrl.u32 %v920, 7
          %v922 = vsub.s32 %v919, %v921
          %v923 = vrot.slane %v916, %v922
          %v924 = vcombine.low %v898, %v899
          %v926 = vunpack.c.l.s4 1983009808
          %v927 = vunpack.c.0.s8 %v926
          %v928 = vlaneseq
          %v929 = vshrl.u32 %v928, 7
          %v930 = vsub.s32 %v927, %v929
          %v931 = vrot.slane %v924, %v930
          %v932 = vcombine.low %v907, %v915
          %v933 = vcombine.high %v907, %v915
          %v935 = vunpack.c.l.s4 1934713408
          %v936 = vunpack.c.0.s8 %v935
          %v937 = vlaneseq
          %v938 = vshrl.u32 %v937, 7
          %v939 = vsub.s32 %v936, %v938
          %v940 = vrot.slane %v932, %v939
          %v942 = vunpack.c.l.s4 1934713408
          %v943 = vunpack.c.0.s8 %v942
          %v944 = vlaneseq
          %v945 = vshrl.u32 %v944, 7
          %v946 = vsub.s32 %v943, %v945
          %v947 = vrot.slane %v933, %v946
          %v948 = vcombine.low %v923, %v931
          %v949 = vcombine.high %v923, %v931
          %v951 = vunpack.c.l.s4 1934713408
          %v952 = vunpack.c.0.s8 %v951
          %v953 = vlaneseq
          %v954 = vshrl.u32 %v953, 7
          %v955 = vsub.s32 %v952, %v954
          %v956 = vrot.slane %v948, %v955
          %v958 = vunpack.c.l.s4 1934713408
          %v959 = vunpack.c.0.s8 %v958
          %v960 = vlaneseq
          %v961 = vshrl.u32 %v960, 7
          %v962 = vsub.s32 %v959, %v961
          %v963 = vrot.slane %v949, %v962
          %v964 = vcombine.low %v940, %v956
          %v965 = vcombine.high %v940, %v956
          %v966 = vcombine.low %v947, %v963
          %v967 = vcombine.high %v947, %v963
          %968 = vst.msk [vmem:[#allocation3] sm:$0xff] %vm815, %v964
          %969 = vst.msk [vmem:[#allocation3 + $0x8] sm:$0xff] %vm815, %v965
          %970 = vst.msk [vmem:[#allocation3 + $0x10] sm:$0xff] %vm815, %v966
          %971 = vst.msk [vmem:[#allocation3 + $0x18] sm:$0xff] %vm815, %v967
        $region92: #{tpu_custom_call.1} parent=79 // pred_fallthru
          _
        %s972 = smul.u32 %s43, 8
        %s973 = scalar_lea.vmem %s521, %s972 [#allocation4]
        %v974 = vld [vmem:[%s973] sm:$0xff]
        %v975 = vld [vmem:[%s1] sm:$0xff]
        %v976 = vld [vmem:[%s1 + $0x8] sm:$0xff]
        %v977 = vld [vmem:[%s1 + $0x10] sm:$0xff]
        %v978 = vld [vmem:[%s1 + $0x18] sm:$0xff]
        %v979 = vld [vmem:[%s3] sm:$0x1]
        %v981 = vlaneseq
        %v982 = vshrl.u32 %v981, 7
        %v983 = vsub.s32 0, %v982
        %v984 = vrot.slane %v979, %v983
        %vm986 = vcmask 261120
        %v988 = vsel %vm986, %v974, 0
        %990 = vmatprep.subr.mxu0 0.0
        %991 = vmatpush1.msra.mxu0 %v975
        %992 = vmatprep.subr.mxu0 0.0
        %993 = vmatpush1.msra.mxu0 %v976
        %994 = vmatprep.subr.mxu0 0.0
        %995 = vmatpush1.msra.mxu0 %v977
        %996 = vmatprep.subr.mxu0 0.0
        %997 = vmatpush1.msra.mxu0 %v978
        %998 = vmatprep.subr.mxu0 0.0
        %999 = vmatpush1.msra.mxu0 0.0
        %1000 = vmatprep.subr.mxu0 0.0
        %1001 = vmatpush1.msra.mxu0 0.0
        %1002 = vmatprep.subr.mxu0 0.0
        %1003 = vmatpush1.msra.mxu0 0.0
        %1004 = vmatprep.subr.mxu0 0.0
        %1005 = vmatpush1.msra.mxu0 0.0
        %1006 = vmatprep.subr.mxu0 0.0
        %1007 = vmatpush1.msra.mxu0 0.0
        %1008 = vmatprep.subr.mxu0 0.0
        %1009 = vmatpush1.msra.mxu0 0.0
        %1010 = vmatprep.subr.mxu0 0.0
        %1011 = vmatpush1.msra.mxu0 0.0
        %1012 = vmatprep.subr.mxu0 0.0
        %1013 = vmatpush1.msra.mxu0 0.0
        %1014 = vmatprep.subr.mxu0 0.0
        %1015 = vmatpush1.msra.mxu0 0.0
        %1016 = vmatprep.subr.mxu0 0.0
        %1017 = vmatpush1.msra.mxu0 0.0
        %1018 = vmatprep.subr.mxu0 0.0
        %1019 = vmatpush1.msra.mxu0 0.0
        %1020 = vmatprep.subr.mxu0 0.0
        %1021 = vmatpush1.msra.mxu0 0.0
        %1022 = vmatprep.subr.mxu0 0.0
        %1023 = vmatpush1.msra.mxu0 0.0
        %1024 = vmatprep.subr.mxu0 0.0
        %1025 = vmatpush1.msra.mxu0 0.0
        %1026 = vmatprep.subr.mxu0 0.0
        %1027 = vmatpush1.msra.mxu0 0.0
        %1028 = vmatprep.subr.mxu0 0.0
        %1029 = vmatpush1.msra.mxu0 0.0
        %1030 = vmatprep.subr.mxu0 0.0
        %1031 = vmatpush1.msra.mxu0 0.0
        %1032 = vmatprep.subr.mxu0 0.0
        %1033 = vmatpush1.msra.mxu0 0.0
        %1034 = vmatprep.subr.mxu0 0.0
        %1035 = vmatpush1.msra.mxu0 0.0
        %1036 = vmatprep.subr.mxu0 0.0
        %1037 = vmatpush1.msra.mxu0 0.0
        %1038 = vmatprep.subr.mxu0 0.0
        %1039 = vmatpush1.msra.mxu0 0.0
        %1040 = vmatprep.subr.mxu0 0.0
        %1041 = vmatpush1.msra.mxu0 0.0
        %1042 = vmatprep.subr.mxu0 0.0
        %1043 = vmatpush1.msra.mxu0 0.0
        %1044 = vmatprep.subr.mxu0 0.0
        %1045 = vmatpush1.msra.mxu0 0.0
        %1046 = vmatprep.subr.mxu0 0.0
        %1047 = vmatpush1.msra.mxu0 0.0
        %1048 = vmatprep.subr.mxu0 0.0
        %1049 = vmatpush1.msra.mxu0 0.0
        %1050 = vmatprep.subr.mxu0 0.0
        %1051 = vmatpush1.msra.mxu0 0.0
        %1052 = vmatprep.subr.mxu0 0.0
        %1053 = vmatpush1.msra.mxu0 0.0
        %1054 = vmatprep.mubr.f32.mxu0 0.0
        %1055 = vmatmul.mubr.f32.gmra.mrb[0].mxu0 %v988
        %v1056 = vpop.f32.mrb[0].mxu0
        %v1057 = vadd.f32 %v984, %v1056
        %v1058 = vpop.f32.mrb[0].mxu0
        %1059 = vdwg.mxu0
        %v1060 = vmul.f32 %v1057, 0.35355338
        %1062 = vrot.lane.b32.xlu0 %v1060, 120
        %v1063 = vpop.permute.xlu0 %1062
        %1065 = vrot.lane.b32.xlu0 %v1060, 112
        %v1066 = vpop.permute.xlu0 %1065
        %1068 = vrot.lane.b32.xlu0 %v1060, 104
        %v1069 = vpop.permute.xlu0 %1068
        %v1071 = vcombine.low %v1060, %v1066
        %v1072 = vcombine.high %v1060, %v1066
        %v1074 = vunpack.c.l.s4 1983009808
        %v1075 = vunpack.c.0.s8 %v1074
        %v1076 = vlaneseq
        %v1077 = vshrl.u32 %v1076, 7
        %v1078 = vsub.s32 %v1075, %v1077
        %v1079 = vrot.slane %v1071, %v1078
        %v1081 = vunpack.c.l.s4 1983009808
        %v1082 = vunpack.c.0.s8 %v1081
        %v1083 = vlaneseq
        %v1084 = vshrl.u32 %v1083, 7
        %v1085 = vsub.s32 %v1082, %v1084
        %v1086 = vrot.slane %v1072, %v1085
        %v1087 = vcombine.low %v1063, %v1069
        %v1088 = vcombine.high %v1063, %v1069
        %v1090 = vunpack.c.l.s4 1983009808
        %v1091 = vunpack.c.0.s8 %v1090
        %v1092 = vlaneseq
        %v1093 = vshrl.u32 %v1092, 7
        %v1094 = vsub.s32 %v1091, %v1093
        %v1095 = vrot.slane %v1087, %v1094
        %v1097 = vunpack.c.l.s4 1983009808
        %v1098 = vunpack.c.0.s8 %v1097
        %v1099 = vlaneseq
        %v1100 = vshrl.u32 %v1099, 7
        %v1101 = vsub.s32 %v1098, %v1100
        %v1102 = vrot.slane %v1088, %v1101
        %v1103 = vcombine.low %v1079, %v1095
        %v1104 = vcombine.high %v1079, %v1095
        %v1106 = vunpack.c.l.s4 1934713408
        %v1107 = vunpack.c.0.s8 %v1106
        %v1108 = vlaneseq
        %v1109 = vshrl.u32 %v1108, 7
        %v1110 = vsub.s32 %v1107, %v1109
        %v1111 = vrot.slane %v1103, %v1110
        %v1113 = vunpack.c.l.s4 1934713408
        %v1114 = vunpack.c.0.s8 %v1113
        %v1115 = vlaneseq
        %v1116 = vshrl.u32 %v1115, 7
        %v1117 = vsub.s32 %v1114, %v1116
        %v1118 = vrot.slane %v1104, %v1117
        %v1119 = vcombine.low %v1086, %v1102
        %v1120 = vcombine.high %v1086, %v1102
        %v1122 = vunpack.c.l.s4 1934713408
        %v1123 = vunpack.c.0.s8 %v1122
        %v1124 = vlaneseq
        %v1125 = vshrl.u32 %v1124, 7
        %v1126 = vsub.s32 %v1123, %v1125
        %v1127 = vrot.slane %v1119, %v1126
        %v1129 = vunpack.c.l.s4 1934713408
        %v1130 = vunpack.c.0.s8 %v1129
        %v1131 = vlaneseq
        %v1132 = vshrl.u32 %v1131, 7
        %v1133 = vsub.s32 %v1130, %v1132
        %v1134 = vrot.slane %v1120, %v1133
        %v1135 = vcombine.high %v1111, 0.0
        %v1136 = vcombine.high %v1118, 0.0
        %v1137 = vcombine.high %v1127, 0.0
        %v1138 = vcombine.high %v1134, 0.0
        %v1139 = vcombine.low %v1111, %v1118
        %v1141 = vunpack.c.l.s4 1983009808
        %v1142 = vunpack.c.0.s8 %v1141
        %v1143 = vlaneseq
        %v1144 = vshrl.u32 %v1143, 7
        %v1145 = vsub.s32 %v1142, %v1144
        %v1146 = vrot.slane %v1139, %v1145
        %v1147 = vcombine.low %v1135, %v1136
        %v1149 = vunpack.c.l.s4 1983009808
        %v1150 = vunpack.c.0.s8 %v1149
        %v1151 = vlaneseq
        %v1152 = vshrl.u32 %v1151, 7
        %v1153 = vsub.s32 %v1150, %v1152
        %v1154 = vrot.slane %v1147, %v1153
        %v1155 = vcombine.low %v1127, %v1134
        %v1157 = vunpack.c.l.s4 1983009808
        %v1158 = vunpack.c.0.s8 %v1157
        %v1159 = vlaneseq
        %v1160 = vshrl.u32 %v1159, 7
        %v1161 = vsub.s32 %v1158, %v1160
        %v1162 = vrot.slane %v1155, %v1161
        %v1163 = vcombine.low %v1137, %v1138
        %v1165 = vunpack.c.l.s4 1983009808
        %v1166 = vunpack.c.0.s8 %v1165
        %v1167 = vlaneseq
        %v1168 = vshrl.u32 %v1167, 7
        %v1169 = vsub.s32 %v1166, %v1168
        %v1170 = vrot.slane %v1163, %v1169
        %v1171 = vcombine.low %v1146, %v1154
        %v1172 = vcombine.high %v1146, %v1154
        %v1174 = vunpack.c.l.s4 1934713408
        %v1175 = vunpack.c.0.s8 %v1174
        %v1176 = vlaneseq
        %v1177 = vshrl.u32 %v1176, 7
        %v1178 = vsub.s32 %v1175, %v1177
        %v1179 = vrot.slane %v1171, %v1178
        %v1181 = vunpack.c.l.s4 1934713408
        %v1182 = vunpack.c.0.s8 %v1181
        %v1183 = vlaneseq
        %v1184 = vshrl.u32 %v1183, 7
        %v1185 = vsub.s32 %v1182, %v1184
        %v1186 = vrot.slane %v1172, %v1185
        %v1187 = vcombine.low %v1162, %v1170
        %v1188 = vcombine.high %v1162, %v1170
        %v1190 = vunpack.c.l.s4 1934713408
        %v1191 = vunpack.c.0.s8 %v1190
        %v1192 = vlaneseq
        %v1193 = vshrl.u32 %v1192, 7
        %v1194 = vsub.s32 %v1191, %v1193
        %v1195 = vrot.slane %v1187, %v1194
        %v1197 = vunpack.c.l.s4 1934713408
        %v1198 = vunpack.c.0.s8 %v1197
        %v1199 = vlaneseq
        %v1200 = vshrl.u32 %v1199, 7
        %v1201 = vsub.s32 %v1198, %v1200
        %v1202 = vrot.slane %v1188, %v1201
        %v1203 = vcombine.low %v1179, %v1195
        %v1204 = vcombine.high %v1179, %v1195
        %v1205 = vcombine.low %v1186, %v1202
        %v1206 = vcombine.high %v1186, %v1202
        %v1207 = vld [vmem:[#allocation2] sm:$0xff]
        %v1208 = vld [vmem:[#allocation2 + $0x8] sm:$0xff]
        %v1209 = vld [vmem:[#allocation2 + $0x10] sm:$0xff]
        %v1210 = vld [vmem:[#allocation2 + $0x18] sm:$0xff]
        %vm1211 = vcmask 64512
        %v1213 = vsel %vm1211, %v1203, 0
        %v1216 = vsel %vm1211, %v1207, 0
        %1218 = vmatprep.subr.mxu0 0.0
        %1219 = vmatpush1.xpose.msra.mxu0 %v1216
        %1220 = vmatprep.subr.mxu0 0.0
        %1221 = vmatpush1.xpose.msra.mxu0 0.0
        %1222 = vmatprep.subr.mxu0 0.0
        %1223 = vmatpush1.xpose.msra.mxu0 0.0
        %1224 = vmatprep.subr.mxu0 0.0
        %1225 = vmatpush1.xpose.msra.mxu0 0.0
        %1226 = vmatprep.subr.mxu0 0.0
        %1227 = vmatpush1.xpose.msra.mxu0 0.0
        %1228 = vmatprep.subr.mxu0 0.0
        %1229 = vmatpush1.xpose.msra.mxu0 0.0
        %1230 = vmatprep.subr.mxu0 0.0
        %1231 = vmatpush1.xpose.msra.mxu0 0.0
        %1232 = vmatprep.subr.mxu0 0.0
        %1233 = vmatpush1.xpose.msra.mxu0 0.0
        %1234 = vmatprep.subr.mxu0 0.0
        %1235 = vmatpush1.xpose.msra.mxu0 0.0
        %1236 = vmatprep.subr.mxu0 0.0
        %1237 = vmatpush1.xpose.msra.mxu0 0.0
        %1238 = vmatprep.subr.mxu0 0.0
        %1239 = vmatpush1.xpose.msra.mxu0 0.0
        %1240 = vmatprep.subr.mxu0 0.0
        %1241 = vmatpush1.xpose.msra.mxu0 0.0
        %1242 = vmatprep.subr.mxu0 0.0
        %1243 = vmatpush1.xpose.msra.mxu0 0.0
        %1244 = vmatprep.subr.mxu0 0.0
        %1245 = vmatpush1.xpose.msra.mxu0 0.0
        %1246 = vmatprep.subr.mxu0 0.0
        %1247 = vmatpush1.xpose.msra.mxu0 0.0
        %1248 = vmatprep.subr.mxu0 0.0
        %1249 = vmatpush1.xpose.msra.mxu0 0.0
        %1250 = vmatprep.subr.mxu0 0.0
        %1251 = vmatpush1.xpose.msra.mxu0 0.0
        %1252 = vmatprep.subr.mxu0 0.0
        %1253 = vmatpush1.xpose.msra.mxu0 0.0
        %1254 = vmatprep.subr.mxu0 0.0
        %1255 = vmatpush1.xpose.msra.mxu0 0.0
        %1256 = vmatprep.subr.mxu0 0.0
        %1257 = vmatpush1.xpose.msra.mxu0 0.0
        %1258 = vmatprep.subr.mxu0 0.0
        %1259 = vmatpush1.xpose.msra.mxu0 0.0
        %1260 = vmatprep.subr.mxu0 0.0
        %1261 = vmatpush1.xpose.msra.mxu0 0.0
        %1262 = vmatprep.subr.mxu0 0.0
        %1263 = vmatpush1.xpose.msra.mxu0 0.0
        %1264 = vmatprep.subr.mxu0 0.0
        %1265 = vmatpush1.xpose.msra.mxu0 0.0
        %1266 = vmatprep.subr.mxu0 0.0
        %1267 = vmatpush1.xpose.msra.mxu0 0.0
        %1268 = vmatprep.subr.mxu0 0.0
        %1269 = vmatpush1.xpose.msra.mxu0 0.0
        %1270 = vmatprep.subr.mxu0 0.0
        %1271 = vmatpush1.xpose.msra.mxu0 0.0
        %1272 = vmatprep.subr.mxu0 0.0
        %1273 = vmatpush1.xpose.msra.mxu0 0.0
        %1274 = vmatprep.subr.mxu0 0.0
        %1275 = vmatpush1.xpose.msra.mxu0 0.0
        %1276 = vmatprep.subr.mxu0 0.0
        %1277 = vmatpush1.xpose.msra.mxu0 0.0
        %1278 = vmatprep.subr.mxu0 0.0
        %1279 = vmatpush1.xpose.msra.mxu0 0.0
        %1280 = vmatprep.subr.mxu0 0.0
        %1281 = vmatpush1.xpose.msra.mxu0 0.0
        %1282 = vmatprep.mubr.f32.mxu0 0.0
        %1283 = vmatmul.mubr.f32.gmra.mrb[0].mxu0 %v1213
        %v1284 = vpop.f32.mrb[0].mxu0
        %v1285 = vadd.f32 0.0, %v1284
        %v1286 = vpop.f32.mrb[0].mxu0
        %1287 = vdwg.mxu0
        %v1289 = vsel %vm1211, %v1204, 0
        %v1292 = vsel %vm1211, %v1208, 0
        %1294 = vmatprep.subr.mxu0 0.0
        %1295 = vmatpush1.xpose.msra.mxu0 %v1292
        %1296 = vmatprep.subr.mxu0 0.0
        %1297 = vmatpush1.xpose.msra.mxu0 0.0
        %1298 = vmatprep.subr.mxu0 0.0
        %1299 = vmatpush1.xpose.msra.mxu0 0.0
        %1300 = vmatprep.subr.mxu0 0.0
        %1301 = vmatpush1.xpose.msra.mxu0 0.0
        %1302 = vmatprep.subr.mxu0 0.0
        %1303 = vmatpush1.xpose.msra.mxu0 0.0
        %1304 = vmatprep.subr.mxu0 0.0
        %1305 = vmatpush1.xpose.msra.mxu0 0.0
        %1306 = vmatprep.subr.mxu0 0.0
        %1307 = vmatpush1.xpose.msra.mxu0 0.0
        %1308 = vmatprep.subr.mxu0 0.0
        %1309 = vmatpush1.xpose.msra.mxu0 0.0
        %1310 = vmatprep.subr.mxu0 0.0
        %1311 = vmatpush1.xpose.msra.mxu0 0.0
        %1312 = vmatprep.subr.mxu0 0.0
        %1313 = vmatpush1.xpose.msra.mxu0 0.0
        %1314 = vmatprep.subr.mxu0 0.0
        %1315 = vmatpush1.xpose.msra.mxu0 0.0
        %1316 = vmatprep.subr.mxu0 0.0
        %1317 = vmatpush1.xpose.msra.mxu0 0.0
        %1318 = vmatprep.subr.mxu0 0.0
        %1319 = vmatpush1.xpose.msra.mxu0 0.0
        %1320 = vmatprep.subr.mxu0 0.0
        %1321 = vmatpush1.xpose.msra.mxu0 0.0
        %1322 = vmatprep.subr.mxu0 0.0
        %1323 = vmatpush1.xpose.msra.mxu0 0.0
        %1324 = vmatprep.subr.mxu0 0.0
        %1325 = vmatpush1.xpose.msra.mxu0 0.0
        %1326 = vmatprep.subr.mxu0 0.0
        %1327 = vmatpush1.xpose.msra.mxu0 0.0
        %1328 = vmatprep.subr.mxu0 0.0
        %1329 = vmatpush1.xpose.msra.mxu0 0.0
        %1330 = vmatprep.subr.mxu0 0.0
        %1331 = vmatpush1.xpose.msra.mxu0 0.0
        %1332 = vmatprep.subr.mxu0 0.0
        %1333 = vmatpush1.xpose.msra.mxu0 0.0
        %1334 = vmatprep.subr.mxu0 0.0
        %1335 = vmatpush1.xpose.msra.mxu0 0.0
        %1336 = vmatprep.subr.mxu0 0.0
        %1337 = vmatpush1.xpose.msra.mxu0 0.0
        %1338 = vmatprep.subr.mxu0 0.0
        %1339 = vmatpush1.xpose.msra.mxu0 0.0
        %1340 = vmatprep.subr.mxu0 0.0
        %1341 = vmatpush1.xpose.msra.mxu0 0.0
        %1342 = vmatprep.subr.mxu0 0.0
        %1343 = vmatpush1.xpose.msra.mxu0 0.0
        %1344 = vmatprep.subr.mxu0 0.0
        %1345 = vmatpush1.xpose.msra.mxu0 0.0
        %1346 = vmatprep.subr.mxu0 0.0
        %1347 = vmatpush1.xpose.msra.mxu0 0.0
        %1348 = vmatprep.subr.mxu0 0.0
        %1349 = vmatpush1.xpose.msra.mxu0 0.0
        %1350 = vmatprep.subr.mxu0 0.0
        %1351 = vmatpush1.xpose.msra.mxu0 0.0
        %1352 = vmatprep.subr.mxu0 0.0
        %1353 = vmatpush1.xpose.msra.mxu0 0.0
        %1354 = vmatprep.subr.mxu0 0.0
        %1355 = vmatpush1.xpose.msra.mxu0 0.0
        %1356 = vmatprep.subr.mxu0 0.0
        %1357 = vmatpush1.xpose.msra.mxu0 0.0
        %1358 = vmatprep.mubr.f32.mxu0 0.0
        %1359 = vmatmul.mubr.f32.gmra.mrb[0].mxu0 %v1289
        %v1360 = vpop.f32.mrb[0].mxu0
        %v1361 = vadd.f32 0.0, %v1360
        %v1362 = vpop.f32.mrb[0].mxu0
        %1363 = vdwg.mxu0
        %v1365 = vsel %vm1211, %v1205, 0
        %v1368 = vsel %vm1211, %v1209, 0
        %1370 = vmatprep.subr.mxu0 0.0
        %1371 = vmatpush1.xpose.msra.mxu0 %v1368
        %1372 = vmatprep.subr.mxu0 0.0
        %1373 = vmatpush1.xpose.msra.mxu0 0.0
        %1374 = vmatprep.subr.mxu0 0.0
        %1375 = vmatpush1.xpose.msra.mxu0 0.0
        %1376 = vmatprep.subr.mxu0 0.0
        %1377 = vmatpush1.xpose.msra.mxu0 0.0
        %1378 = vmatprep.subr.mxu0 0.0
        %1379 = vmatpush1.xpose.msra.mxu0 0.0
        %1380 = vmatprep.subr.mxu0 0.0
        %1381 = vmatpush1.xpose.msra.mxu0 0.0
        %1382 = vmatprep.subr.mxu0 0.0
        %1383 = vmatpush1.xpose.msra.mxu0 0.0
        %1384 = vmatprep.subr.mxu0 0.0
        %1385 = vmatpush1.xpose.msra.mxu0 0.0
        %1386 = vmatprep.subr.mxu0 0.0
        %1387 = vmatpush1.xpose.msra.mxu0 0.0
        %1388 = vmatprep.subr.mxu0 0.0
        %1389 = vmatpush1.xpose.msra.mxu0 0.0
        %1390 = vmatprep.subr.mxu0 0.0
        %1391 = vmatpush1.xpose.msra.mxu0 0.0
        %1392 = vmatprep.subr.mxu0 0.0
        %1393 = vmatpush1.xpose.msra.mxu0 0.0
        %1394 = vmatprep.subr.mxu0 0.0
        %1395 = vmatpush1.xpose.msra.mxu0 0.0
        %1396 = vmatprep.subr.mxu0 0.0
        %1397 = vmatpush1.xpose.msra.mxu0 0.0
        %1398 = vmatprep.subr.mxu0 0.0
        %1399 = vmatpush1.xpose.msra.mxu0 0.0
        %1400 = vmatprep.subr.mxu0 0.0
        %1401 = vmatpush1.xpose.msra.mxu0 0.0
        %1402 = vmatprep.subr.mxu0 0.0
        %1403 = vmatpush1.xpose.msra.mxu0 0.0
        %1404 = vmatprep.subr.mxu0 0.0
        %1405 = vmatpush1.xpose.msra.mxu0 0.0
        %1406 = vmatprep.subr.mxu0 0.0
        %1407 = vmatpush1.xpose.msra.mxu0 0.0
        %1408 = vmatprep.subr.mxu0 0.0
        %1409 = vmatpush1.xpose.msra.mxu0 0.0
        %1410 = vmatprep.subr.mxu0 0.0
        %1411 = vmatpush1.xpose.msra.mxu0 0.0
        %1412 = vmatprep.subr.mxu0 0.0
        %1413 = vmatpush1.xpose.msra.mxu0 0.0
        %1414 = vmatprep.subr.mxu0 0.0
        %1415 = vmatpush1.xpose.msra.mxu0 0.0
        %1416 = vmatprep.subr.mxu0 0.0
        %1417 = vmatpush1.xpose.msra.mxu0 0.0
        %1418 = vmatprep.subr.mxu0 0.0
        %1419 = vmatpush1.xpose.msra.mxu0 0.0
        %1420 = vmatprep.subr.mxu0 0.0
        %1421 = vmatpush1.xpose.msra.mxu0 0.0
        %1422 = vmatprep.subr.mxu0 0.0
        %1423 = vmatpush1.xpose.msra.mxu0 0.0
        %1424 = vmatprep.subr.mxu0 0.0
        %1425 = vmatpush1.xpose.msra.mxu0 0.0
        %1426 = vmatprep.subr.mxu0 0.0
        %1427 = vmatpush1.xpose.msra.mxu0 0.0
        %1428 = vmatprep.subr.mxu0 0.0
        %1429 = vmatpush1.xpose.msra.mxu0 0.0
        %1430 = vmatprep.subr.mxu0 0.0
        %1431 = vmatpush1.xpose.msra.mxu0 0.0
        %1432 = vmatprep.subr.mxu0 0.0
        %1433 = vmatpush1.xpose.msra.mxu0 0.0
        %1434 = vmatprep.mubr.f32.mxu0 0.0
        %1435 = vmatmul.mubr.f32.gmra.mrb[0].mxu0 %v1365
        %v1436 = vpop.f32.mrb[0].mxu0
        %v1437 = vadd.f32 0.0, %v1436
        %v1438 = vpop.f32.mrb[0].mxu0
        %1439 = vdwg.mxu0
        %v1441 = vsel %vm1211, %v1206, 0
        %v1444 = vsel %vm1211, %v1210, 0
        %1446 = vmatprep.subr.mxu0 0.0
        %1447 = vmatpush1.xpose.msra.mxu0 %v1444
        %1448 = vmatprep.subr.mxu0 0.0
        %1449 = vmatpush1.xpose.msra.mxu0 0.0
        %1450 = vmatprep.subr.mxu0 0.0
        %1451 = vmatpush1.xpose.msra.mxu0 0.0
        %1452 = vmatprep.subr.mxu0 0.0
        %1453 = vmatpush1.xpose.msra.mxu0 0.0
        %1454 = vmatprep.subr.mxu0 0.0
        %1455 = vmatpush1.xpose.msra.mxu0 0.0
        %1456 = vmatprep.subr.mxu0 0.0
        %1457 = vmatpush1.xpose.msra.mxu0 0.0
        %1458 = vmatprep.subr.mxu0 0.0
        %1459 = vmatpush1.xpose.msra.mxu0 0.0
        %1460 = vmatprep.subr.mxu0 0.0
        %1461 = vmatpush1.xpose.msra.mxu0 0.0
        %1462 = vmatprep.subr.mxu0 0.0
        %1463 = vmatpush1.xpose.msra.mxu0 0.0
        %1464 = vmatprep.subr.mxu0 0.0
        %1465 = vmatpush1.xpose.msra.mxu0 0.0
        %1466 = vmatprep.subr.mxu0 0.0
        %1467 = vmatpush1.xpose.msra.mxu0 0.0
        %1468 = vmatprep.subr.mxu0 0.0
        %1469 = vmatpush1.xpose.msra.mxu0 0.0
        %1470 = vmatprep.subr.mxu0 0.0
        %1471 = vmatpush1.xpose.msra.mxu0 0.0
        %1472 = vmatprep.subr.mxu0 0.0
        %1473 = vmatpush1.xpose.msra.mxu0 0.0
        %1474 = vmatprep.subr.mxu0 0.0
        %1475 = vmatpush1.xpose.msra.mxu0 0.0
        %1476 = vmatprep.subr.mxu0 0.0
        %1477 = vmatpush1.xpose.msra.mxu0 0.0
        %1478 = vmatprep.subr.mxu0 0.0
        %1479 = vmatpush1.xpose.msra.mxu0 0.0
        %1480 = vmatprep.subr.mxu0 0.0
        %1481 = vmatpush1.xpose.msra.mxu0 0.0
        %1482 = vmatprep.subr.mxu0 0.0
        %1483 = vmatpush1.xpose.msra.mxu0 0.0
        %1484 = vmatprep.subr.mxu0 0.0
        %1485 = vmatpush1.xpose.msra.mxu0 0.0
        %1486 = vmatprep.subr.mxu0 0.0
        %1487 = vmatpush1.xpose.msra.mxu0 0.0
        %1488 = vmatprep.subr.mxu0 0.0
        %1489 = vmatpush1.xpose.msra.mxu0 0.0
        %1490 = vmatprep.subr.mxu0 0.0
        %1491 = vmatpush1.xpose.msra.mxu0 0.0
        %1492 = vmatprep.subr.mxu0 0.0
        %1493 = vmatpush1.xpose.msra.mxu0 0.0
        %1494 = vmatprep.subr.mxu0 0.0
        %1495 = vmatpush1.xpose.msra.mxu0 0.0
        %1496 = vmatprep.subr.mxu0 0.0
        %1497 = vmatpush1.xpose.msra.mxu0 0.0
        %1498 = vmatprep.subr.mxu0 0.0
        %1499 = vmatpush1.xpose.msra.mxu0 0.0
        %1500 = vmatprep.subr.mxu0 0.0
        %1501 = vmatpush1.xpose.msra.mxu0 0.0
        %1502 = vmatprep.subr.mxu0 0.0
        %1503 = vmatpush1.xpose.msra.mxu0 0.0
        %1504 = vmatprep.subr.mxu0 0.0
        %1505 = vmatpush1.xpose.msra.mxu0 0.0
        %1506 = vmatprep.subr.mxu0 0.0
        %1507 = vmatpush1.xpose.msra.mxu0 0.0
        %1508 = vmatprep.subr.mxu0 0.0
        %1509 = vmatpush1.xpose.msra.mxu0 0.0
        %1510 = vmatprep.mubr.f32.mxu0 0.0
        %1511 = vmatmul.mubr.f32.gmra.mrb[0].mxu0 %v1441
        %v1512 = vpop.f32.mrb[0].mxu0
        %v1513 = vadd.f32 0.0, %v1512
        %v1514 = vpop.f32.mrb[0].mxu0
        %1515 = vdwg.mxu0
        %v1516 = vsel %vm1211, %v1285, -inf
        %1517 = vmax.xlane.f32.xlu0 %v1516
        %v1518 = vpop.xlane.xlu0 %1517
        %v1519 = vsel %vm1211, %v1361, -inf
        %1520 = vmax.xlane.f32.xlu0 %v1519
        %v1521 = vpop.xlane.xlu0 %1520
        %v1522 = vsel %vm1211, %v1437, -inf
        %1523 = vmax.xlane.f32.xlu0 %v1522
        %v1524 = vpop.xlane.xlu0 %1523
        %v1525 = vsel %vm1211, %v1513, -inf
        %1526 = vmax.xlane.f32.xlu0 %v1525
        %v1527 = vpop.xlane.xlu0 %1526
        %v1528 = vsub.f32 %v1285, %v1518
        %v1529 = vsub.f32 %v1361, %v1521
        %v1530 = vsub.f32 %v1437, %v1524
        %v1531 = vsub.f32 %v1513, %v1527
        %v1532 = vmul.f32 %v1528, 1.442695
        %v1533 = vpow.pop %v1532
        %v1534 = vmul.f32 %v1529, 1.442695
        %v1535 = vpow.pop %v1534
        %v1536 = vmul.f32 %v1530, 1.442695
        %v1537 = vpow.pop %v1536
        %v1538 = vmul.f32 %v1531, 1.442695
        %v1539 = vpow.pop %v1538
        %v1540 = vsel %vm1211, %v1533, 0.0
        %1541 = vadd.xlane.f32.xlu0 %v1540
        %v1542 = vpop.xlane.xlu0 %1541
        %v1543 = vsel %vm1211, %v1535, 0.0
        %1544 = vadd.xlane.f32.xlu0 %v1543
        %v1545 = vpop.xlane.xlu0 %1544
        %v1546 = vsel %vm1211, %v1537, 0.0
        %1547 = vadd.xlane.f32.xlu0 %v1546
        %v1548 = vpop.xlane.xlu0 %1547
        %v1549 = vsel %vm1211, %v1539, 0.0
        %1550 = vadd.xlane.f32.xlu0 %v1549
        %v1551 = vpop.xlane.xlu0 %1550
        %v1552 = vrcp.pop %v1542
        %v1553 = vmul.f32 %v1533, %v1552
        %v1554 = vrcp.pop %v1545
        %v1555 = vmul.f32 %v1535, %v1554
        %v1556 = vrcp.pop %v1548
        %v1557 = vmul.f32 %v1537, %v1556
        %v1558 = vrcp.pop %v1551
        %v1559 = vmul.f32 %v1539, %v1558
        %v1560 = vsel %vm1211, %v1553, 0.0
        %v1561 = vsel %vm1211, %v1555, 0.0
        %v1562 = vadd.f32 %v1560, %v1561
        %v1563 = vsel %vm1211, %v1557, 0.0
        %v1564 = vadd.f32 %v1562, %v1563
        %v1565 = vsel %vm1211, %v1559, 0.0
        %v1566 = vadd.f32 %v1564, %v1565
        %v1567 = vrcp.pop 4.0
        %v1568 = vmul.f32 %v1566, %v1567
        %1569 = vst.msk [vmem:[%s578] sm:$0xff] %vm1211, %v1568
        %v1570 = vld [vmem:[#allocation3] sm:$0xff]
        %v1571 = vld [vmem:[#allocation3 + $0x8] sm:$0xff]
        %v1572 = vld [vmem:[#allocation3 + $0x10] sm:$0xff]
        %v1573 = vld [vmem:[#allocation3 + $0x18] sm:$0xff]
        %v1575 = vsel %vm1211, %v1553, 0
        %1577 = vmatprep.subr.mxu0 0.0
        %1578 = vmatpush1.msra.mxu0 %v1570
        %1579 = vmatprep.subr.mxu0 0.0
        %1580 = vmatpush1.msra.mxu0 0.0
        %1581 = vmatprep.subr.mxu0 0.0
        %1582 = vmatpush1.msra.mxu0 0.0
        %1583 = vmatprep.subr.mxu0 0.0
        %1584 = vmatpush1.msra.mxu0 0.0
        %1585 = vmatprep.subr.mxu0 0.0
        %1586 = vmatpush1.msra.mxu0 0.0
        %1587 = vmatprep.subr.mxu0 0.0
        %1588 = vmatpush1.msra.mxu0 0.0
        %1589 = vmatprep.subr.mxu0 0.0
        %1590 = vmatpush1.msra.mxu0 0.0
        %1591 = vmatprep.subr.mxu0 0.0
        %1592 = vmatpush1.msra.mxu0 0.0
        %1593 = vmatprep.subr.mxu0 0.0
        %1594 = vmatpush1.msra.mxu0 0.0
        %1595 = vmatprep.subr.mxu0 0.0
        %1596 = vmatpush1.msra.mxu0 0.0
        %1597 = vmatprep.subr.mxu0 0.0
        %1598 = vmatpush1.msra.mxu0 0.0
        %1599 = vmatprep.subr.mxu0 0.0
        %1600 = vmatpush1.msra.mxu0 0.0
        %1601 = vmatprep.subr.mxu0 0.0
        %1602 = vmatpush1.msra.mxu0 0.0
        %1603 = vmatprep.subr.mxu0 0.0
        %1604 = vmatpush1.msra.mxu0 0.0
        %1605 = vmatprep.subr.mxu0 0.0
        %1606 = vmatpush1.msra.mxu0 0.0
        %1607 = vmatprep.subr.mxu0 0.0
        %1608 = vmatpush1.msra.mxu0 0.0
        %1609 = vmatprep.subr.mxu0 0.0
        %1610 = vmatpush1.msra.mxu0 0.0
        %1611 = vmatprep.subr.mxu0 0.0
        %1612 = vmatpush1.msra.mxu0 0.0
        %1613 = vmatprep.subr.mxu0 0.0
        %1614 = vmatpush1.msra.mxu0 0.0
        %1615 = vmatprep.subr.mxu0 0.0
        %1616 = vmatpush1.msra.mxu0 0.0
        %1617 = vmatprep.subr.mxu0 0.0
        %1618 = vmatpush1.msra.mxu0 0.0
        %1619 = vmatprep.subr.mxu0 0.0
        %1620 = vmatpush1.msra.mxu0 0.0
        %1621 = vmatprep.subr.mxu0 0.0
        %1622 = vmatpush1.msra.mxu0 0.0
        %1623 = vmatprep.subr.mxu0 0.0
        %1624 = vmatpush1.msra.mxu0 0.0
        %1625 = vmatprep.subr.mxu0 0.0
        %1626 = vmatpush1.msra.mxu0 0.0
        %1627 = vmatprep.subr.mxu0 0.0
        %1628 = vmatpush1.msra.mxu0 0.0
        %1629 = vmatprep.subr.mxu0 0.0
        %1630 = vmatpush1.msra.mxu0 0.0
        %1631 = vmatprep.subr.mxu0 0.0
        %1632 = vmatpush1.msra.mxu0 0.0
        %1633 = vmatprep.subr.mxu0 0.0
        %1634 = vmatpush1.msra.mxu0 0.0
        %1635 = vmatprep.subr.mxu0 0.0
        %1636 = vmatpush1.msra.mxu0 0.0
        %1637 = vmatprep.subr.mxu0 0.0
        %1638 = vmatpush1.msra.mxu0 0.0
        %1639 = vmatprep.subr.mxu0 0.0
        %1640 = vmatpush1.msra.mxu0 0.0
        %1641 = vmatprep.mubr.f32.mxu0 0.0
        %1642 = vmatmul.mubr.f32.gmra.mrb[0].mxu0 %v1575
        %v1643 = vpop.f32.mrb[0].mxu0
        %v1644 = vadd.f32 0.0, %v1643
        %v1645 = vpop.f32.mrb[0].mxu0
        %1646 = vdwg.mxu0
        %v1648 = vsel %vm1211, %v1555, 0
        %1650 = vmatprep.subr.mxu0 0.0
        %1651 = vmatpush1.msra.mxu0 %v1571
        %1652 = vmatprep.subr.mxu0 0.0
        %1653 = vmatpush1.msra.mxu0 0.0
        %1654 = vmatprep.subr.mxu0 0.0
        %1655 = vmatpush1.msra.mxu0 0.0
        %1656 = vmatprep.subr.mxu0 0.0
        %1657 = vmatpush1.msra.mxu0 0.0
        %1658 = vmatprep.subr.mxu0 0.0
        %1659 = vmatpush1.msra.mxu0 0.0
        %1660 = vmatprep.subr.mxu0 0.0
        %1661 = vmatpush1.msra.mxu0 0.0
        %1662 = vmatprep.subr.mxu0 0.0
        %1663 = vmatpush1.msra.mxu0 0.0
        %1664 = vmatprep.subr.mxu0 0.0
        %1665 = vmatpush1.msra.mxu0 0.0
        %1666 = vmatprep.subr.mxu0 0.0
        %1667 = vmatpush1.msra.mxu0 0.0
        %1668 = vmatprep.subr.mxu0 0.0
        %1669 = vmatpush1.msra.mxu0 0.0
        %1670 = vmatprep.subr.mxu0 0.0
        %1671 = vmatpush1.msra.mxu0 0.0
        %1672 = vmatprep.subr.mxu0 0.0
        %1673 = vmatpush1.msra.mxu0 0.0
        %1674 = vmatprep.subr.mxu0 0.0
        %1675 = vmatpush1.msra.mxu0 0.0
        %1676 = vmatprep.subr.mxu0 0.0
        %1677 = vmatpush1.msra.mxu0 0.0
        %1678 = vmatprep.subr.mxu0 0.0
        %1679 = vmatpush1.msra.mxu0 0.0
        %1680 = vmatprep.subr.mxu0 0.0
        %1681 = vmatpush1.msra.mxu0 0.0
        %1682 = vmatprep.subr.mxu0 0.0
        %1683 = vmatpush1.msra.mxu0 0.0
        %1684 = vmatprep.subr.mxu0 0.0
        %1685 = vmatpush1.msra.mxu0 0.0
        %1686 = vmatprep.subr.mxu0 0.0
        %1687 = vmatpush1.msra.mxu0 0.0
        %1688 = vmatprep.subr.mxu0 0.0
        %1689 = vmatpush1.msra.mxu0 0.0
        %1690 = vmatprep.subr.mxu0 0.0
        %1691 = vmatpush1.msra.mxu0 0.0
        %1692 = vmatprep.subr.mxu0 0.0
        %1693 = vmatpush1.msra.mxu0 0.0
        %1694 = vmatprep.subr.mxu0 0.0
        %1695 = vmatpush1.msra.mxu0 0.0
        %1696 = vmatprep.subr.mxu0 0.0
        %1697 = vmatpush1.msra.mxu0 0.0
        %1698 = vmatprep.subr.mxu0 0.0
        %1699 = vmatpush1.msra.mxu0 0.0
        %1700 = vmatprep.subr.mxu0 0.0
        %1701 = vmatpush1.msra.mxu0 0.0
        %1702 = vmatprep.subr.mxu0 0.0
        %1703 = vmatpush1.msra.mxu0 0.0
        %1704 = vmatprep.subr.mxu0 0.0
        %1705 = vmatpush1.msra.mxu0 0.0
        %1706 = vmatprep.subr.mxu0 0.0
        %1707 = vmatpush1.msra.mxu0 0.0
        %1708 = vmatprep.subr.mxu0 0.0
        %1709 = vmatpush1.msra.mxu0 0.0
        %1710 = vmatprep.subr.mxu0 0.0
        %1711 = vmatpush1.msra.mxu0 0.0
        %1712 = vmatprep.subr.mxu0 0.0
        %1713 = vmatpush1.msra.mxu0 0.0
        %1714 = vmatprep.mubr.f32.mxu0 0.0
        %1715 = vmatmul.mubr.f32.gmra.mrb[0].mxu0 %v1648
        %v1716 = vpop.f32.mrb[0].mxu0
        %v1717 = vadd.f32 0.0, %v1716
        %v1718 = vpop.f32.mrb[0].mxu0
        %1719 = vdwg.mxu0
        %v1721 = vsel %vm1211, %v1557, 0
        %1723 = vmatprep.subr.mxu0 0.0
        %1724 = vmatpush1.msra.mxu0 %v1572
        %1725 = vmatprep.subr.mxu0 0.0
        %1726 = vmatpush1.msra.mxu0 0.0
        %1727 = vmatprep.subr.mxu0 0.0
        %1728 = vmatpush1.msra.mxu0 0.0
        %1729 = vmatprep.subr.mxu0 0.0
        %1730 = vmatpush1.msra.mxu0 0.0
        %1731 = vmatprep.subr.mxu0 0.0
        %1732 = vmatpush1.msra.mxu0 0.0
        %1733 = vmatprep.subr.mxu0 0.0
        %1734 = vmatpush1.msra.mxu0 0.0
        %1735 = vmatprep.subr.mxu0 0.0
        %1736 = vmatpush1.msra.mxu0 0.0
        %1737 = vmatprep.subr.mxu0 0.0
        %1738 = vmatpush1.msra.mxu0 0.0
        %1739 = vmatprep.subr.mxu0 0.0
        %1740 = vmatpush1.msra.mxu0 0.0
        %1741 = vmatprep.subr.mxu0 0.0
        %1742 = vmatpush1.msra.mxu0 0.0
        %1743 = vmatprep.subr.mxu0 0.0
        %1744 = vmatpush1.msra.mxu0 0.0
        %1745 = vmatprep.subr.mxu0 0.0
        %1746 = vmatpush1.msra.mxu0 0.0
        %1747 = vmatprep.subr.mxu0 0.0
        %1748 = vmatpush1.msra.mxu0 0.0
        %1749 = vmatprep.subr.mxu0 0.0
        %1750 = vmatpush1.msra.mxu0 0.0
        %1751 = vmatprep.subr.mxu0 0.0
        %1752 = vmatpush1.msra.mxu0 0.0
        %1753 = vmatprep.subr.mxu0 0.0
        %1754 = vmatpush1.msra.mxu0 0.0
        %1755 = vmatprep.subr.mxu0 0.0
        %1756 = vmatpush1.msra.mxu0 0.0
        %1757 = vmatprep.subr.mxu0 0.0
        %1758 = vmatpush1.msra.mxu0 0.0
        %1759 = vmatprep.subr.mxu0 0.0
        %1760 = vmatpush1.msra.mxu0 0.0
        %1761 = vmatprep.subr.mxu0 0.0
        %1762 = vmatpush1.msra.mxu0 0.0
        %1763 = vmatprep.subr.mxu0 0.0
        %1764 = vmatpush1.msra.mxu0 0.0
        %1765 = vmatprep.subr.mxu0 0.0
        %1766 = vmatpush1.msra.mxu0 0.0
        %1767 = vmatprep.subr.mxu0 0.0
        %1768 = vmatpush1.msra.mxu0 0.0
        %1769 = vmatprep.subr.mxu0 0.0
        %1770 = vmatpush1.msra.mxu0 0.0
        %1771 = vmatprep.subr.mxu0 0.0
        %1772 = vmatpush1.msra.mxu0 0.0
        %1773 = vmatprep.subr.mxu0 0.0
        %1774 = vmatpush1.msra.mxu0 0.0
        %1775 = vmatprep.subr.mxu0 0.0
        %1776 = vmatpush1.msra.mxu0 0.0
        %1777 = vmatprep.subr.mxu0 0.0
        %1778 = vmatpush1.msra.mxu0 0.0
        %1779 = vmatprep.subr.mxu0 0.0
        %1780 = vmatpush1.msra.mxu0 0.0
        %1781 = vmatprep.subr.mxu0 0.0
        %1782 = vmatpush1.msra.mxu0 0.0
        %1783 = vmatprep.subr.mxu0 0.0
        %1784 = vmatpush1.msra.mxu0 0.0
        %1785 = vmatprep.subr.mxu0 0.0
        %1786 = vmatpush1.msra.mxu0 0.0
        %1787 = vmatprep.mubr.f32.mxu0 0.0
        %1788 = vmatmul.mubr.f32.gmra.mrb[0].mxu0 %v1721
        %v1789 = vpop.f32.mrb[0].mxu0
        %v1790 = vadd.f32 0.0, %v1789
        %v1791 = vpop.f32.mrb[0].mxu0
        %1792 = vdwg.mxu0
        %v1794 = vsel %vm1211, %v1559, 0
        %1796 = vmatprep.subr.mxu0 0.0
        %1797 = vmatpush1.msra.mxu0 %v1573
        %1798 = vmatprep.subr.mxu0 0.0
        %1799 = vmatpush1.msra.mxu0 0.0
        %1800 = vmatprep.subr.mxu0 0.0
        %1801 = vmatpush1.msra.mxu0 0.0
        %1802 = vmatprep.subr.mxu0 0.0
        %1803 = vmatpush1.msra.mxu0 0.0
        %1804 = vmatprep.subr.mxu0 0.0
        %1805 = vmatpush1.msra.mxu0 0.0
        %1806 = vmatprep.subr.mxu0 0.0
        %1807 = vmatpush1.msra.mxu0 0.0
        %1808 = vmatprep.subr.mxu0 0.0
        %1809 = vmatpush1.msra.mxu0 0.0
        %1810 = vmatprep.subr.mxu0 0.0
        %1811 = vmatpush1.msra.mxu0 0.0
        %1812 = vmatprep.subr.mxu0 0.0
        %1813 = vmatpush1.msra.mxu0 0.0
        %1814 = vmatprep.subr.mxu0 0.0
        %1815 = vmatpush1.msra.mxu0 0.0
        %1816 = vmatprep.subr.mxu0 0.0
        %1817 = vmatpush1.msra.mxu0 0.0
        %1818 = vmatprep.subr.mxu0 0.0
        %1819 = vmatpush1.msra.mxu0 0.0
        %1820 = vmatprep.subr.mxu0 0.0
        %1821 = vmatpush1.msra.mxu0 0.0
        %1822 = vmatprep.subr.mxu0 0.0
        %1823 = vmatpush1.msra.mxu0 0.0
        %1824 = vmatprep.subr.mxu0 0.0
        %1825 = vmatpush1.msra.mxu0 0.0
        %1826 = vmatprep.subr.mxu0 0.0
        %1827 = vmatpush1.msra.mxu0 0.0
        %1828 = vmatprep.subr.mxu0 0.0
        %1829 = vmatpush1.msra.mxu0 0.0
        %1830 = vmatprep.subr.mxu0 0.0
        %1831 = vmatpush1.msra.mxu0 0.0
        %1832 = vmatprep.subr.mxu0 0.0
        %1833 = vmatpush1.msra.mxu0 0.0
        %1834 = vmatprep.subr.mxu0 0.0
        %1835 = vmatpush1.msra.mxu0 0.0
        %1836 = vmatprep.subr.mxu0 0.0
        %1837 = vmatpush1.msra.mxu0 0.0
        %1838 = vmatprep.subr.mxu0 0.0
        %1839 = vmatpush1.msra.mxu0 0.0
        %1840 = vmatprep.subr.mxu0 0.0
        %1841 = vmatpush1.msra.mxu0 0.0
        %1842 = vmatprep.subr.mxu0 0.0
        %1843 = vmatpush1.msra.mxu0 0.0
        %1844 = vmatprep.subr.mxu0 0.0
        %1845 = vmatpush1.msra.mxu0 0.0
        %1846 = vmatprep.subr.mxu0 0.0
        %1847 = vmatpush1.msra.mxu0 0.0
        %1848 = vmatprep.subr.mxu0 0.0
        %1849 = vmatpush1.msra.mxu0 0.0
        %1850 = vmatprep.subr.mxu0 0.0
        %1851 = vmatpush1.msra.mxu0 0.0
        %1852 = vmatprep.subr.mxu0 0.0
        %1853 = vmatpush1.msra.mxu0 0.0
        %1854 = vmatprep.subr.mxu0 0.0
        %1855 = vmatpush1.msra.mxu0 0.0
        %1856 = vmatprep.subr.mxu0 0.0
        %1857 = vmatpush1.msra.mxu0 0.0
        %1858 = vmatprep.subr.mxu0 0.0
        %1859 = vmatpush1.msra.mxu0 0.0
        %1860 = vmatprep.mubr.f32.mxu0 0.0
        %1861 = vmatmul.mubr.f32.gmra.mrb[0].mxu0 %v1794
        %v1862 = vpop.f32.mrb[0].mxu0
        %v1863 = vadd.f32 0.0, %v1862
        %v1864 = vpop.f32.mrb[0].mxu0
        %1865 = vdwg.mxu0
        %v1866 = vcombine.low %v1644, %v1790
        %v1867 = vcombine.high %v1644, %v1790
        %v1869 = vunpack.c.l.s4 1983009808
        %v1870 = vunpack.c.0.s8 %v1869
        %v1871 = vlaneseq
        %v1872 = vshrl.u32 %v1871, 7
        %v1873 = vsub.s32 %v1870, %v1872
        %v1874 = vrot.slane %v1866, %v1873
        %v1876 = vunpack.c.l.s4 1983009808
        %v1877 = vunpack.c.0.s8 %v1876
        %v1878 = vlaneseq
        %v1879 = vshrl.u32 %v1878, 7
        %v1880 = vsub.s32 %v1877, %v1879
        %v1881 = vrot.slane %v1867, %v1880
        %v1882 = vcombine.low %v1717, %v1863
        %v1883 = vcombine.high %v1717, %v1863
        %v1885 = vunpack.c.l.s4 1983009808
        %v1886 = vunpack.c.0.s8 %v1885
        %v1887 = vlaneseq
        %v1888 = vshrl.u32 %v1887, 7
        %v1889 = vsub.s32 %v1886, %v1888
        %v1890 = vrot.slane %v1882, %v1889
        %v1892 = vunpack.c.l.s4 1983009808
        %v1893 = vunpack.c.0.s8 %v1892
        %v1894 = vlaneseq
        %v1895 = vshrl.u32 %v1894, 7
        %v1896 = vsub.s32 %v1893, %v1895
        %v1897 = vrot.slane %v1883, %v1896
        %v1898 = vcombine.low %v1874, %v1890
        %v1899 = vcombine.high %v1874, %v1890
        %v1901 = vunpack.c.l.s4 1934713408
        %v1902 = vunpack.c.0.s8 %v1901
        %v1903 = vlaneseq
        %v1904 = vshrl.u32 %v1903, 7
        %v1905 = vsub.s32 %v1902, %v1904
        %v1906 = vrot.slane %v1898, %v1905
        %v1908 = vunpack.c.l.s4 1934713408
        %v1909 = vunpack.c.0.s8 %v1908
        %v1910 = vlaneseq
        %v1911 = vshrl.u32 %v1910, 7
        %v1912 = vsub.s32 %v1909, %v1911
        %v1913 = vrot.slane %v1899, %v1912
        %v1914 = vcombine.low %v1881, %v1897
        %v1915 = vcombine.high %v1881, %v1897
        %v1917 = vunpack.c.l.s4 1934713408
        %v1918 = vunpack.c.0.s8 %v1917
        %v1919 = vlaneseq
        %v1920 = vshrl.u32 %v1919, 7
        %v1921 = vsub.s32 %v1918, %v1920
        %v1922 = vrot.slane %v1914, %v1921
        %v1924 = vunpack.c.l.s4 1934713408
        %v1925 = vunpack.c.0.s8 %v1924
        %v1926 = vlaneseq
        %v1927 = vshrl.u32 %v1926, 7
        %v1928 = vsub.s32 %v1925, %v1927
        %v1929 = vrot.slane %v1915, %v1928
        %v1930 = vcombine.high %v1906, 0.0
        %v1931 = vcombine.high %v1913, 0.0
        %v1932 = vcombine.high %v1922, 0.0
        %v1933 = vcombine.high %v1929, 0.0
        %v1934 = vcombine.low %v1906, %v1913
        %v1936 = vunpack.c.l.s4 1983009808
        %v1937 = vunpack.c.0.s8 %v1936
        %v1938 = vlaneseq
        %v1939 = vshrl.u32 %v1938, 7
        %v1940 = vsub.s32 %v1937, %v1939
        %v1941 = vrot.slane %v1934, %v1940
        %v1942 = vcombine.low %v1930, %v1931
        %v1944 = vunpack.c.l.s4 1983009808
        %v1945 = vunpack.c.0.s8 %v1944
        %v1946 = vlaneseq
        %v1947 = vshrl.u32 %v1946, 7
        %v1948 = vsub.s32 %v1945, %v1947
        %v1949 = vrot.slane %v1942, %v1948
        %v1950 = vcombine.low %v1922, %v1929
        %v1952 = vunpack.c.l.s4 1983009808
        %v1953 = vunpack.c.0.s8 %v1952
        %v1954 = vlaneseq
        %v1955 = vshrl.u32 %v1954, 7
        %v1956 = vsub.s32 %v1953, %v1955
        %v1957 = vrot.slane %v1950, %v1956
        %v1958 = vcombine.low %v1932, %v1933
        %v1960 = vunpack.c.l.s4 1983009808
        %v1961 = vunpack.c.0.s8 %v1960
        %v1962 = vlaneseq
        %v1963 = vshrl.u32 %v1962, 7
        %v1964 = vsub.s32 %v1961, %v1963
        %v1965 = vrot.slane %v1958, %v1964
        %v1966 = vcombine.low %v1941, %v1949
        %v1967 = vcombine.high %v1941, %v1949
        %v1969 = vunpack.c.l.s4 1934713408
        %v1970 = vunpack.c.0.s8 %v1969
        %v1971 = vlaneseq
        %v1972 = vshrl.u32 %v1971, 7
        %v1973 = vsub.s32 %v1970, %v1972
        %v1974 = vrot.slane %v1966, %v1973
        %v1976 = vunpack.c.l.s4 1934713408
        %v1977 = vunpack.c.0.s8 %v1976
        %v1978 = vlaneseq
        %v1979 = vshrl.u32 %v1978, 7
        %v1980 = vsub.s32 %v1977, %v1979
        %v1981 = vrot.slane %v1967, %v1980
        %v1982 = vcombine.low %v1957, %v1965
        %v1983 = vcombine.high %v1957, %v1965
        %v1985 = vunpack.c.l.s4 1934713408
        %v1986 = vunpack.c.0.s8 %v1985
        %v1987 = vlaneseq
        %v1988 = vshrl.u32 %v1987, 7
        %v1989 = vsub.s32 %v1986, %v1988
        %v1990 = vrot.slane %v1982, %v1989
        %v1992 = vunpack.c.l.s4 1934713408
        %v1993 = vunpack.c.0.s8 %v1992
        %v1994 = vlaneseq
        %v1995 = vshrl.u32 %v1994, 7
        %v1996 = vsub.s32 %v1993, %v1995
        %v1997 = vrot.slane %v1983, %v1996
        %v1998 = vcombine.low %v1974, %v1990
        %v1999 = vcombine.high %v1974, %v1990
        %v2000 = vcombine.low %v1981, %v1997
        %v2001 = vcombine.high %v1981, %v1997
        %2003 = vrot.lane.b32.xlu0 %v1999, 8
        %v2004 = vpop.permute.xlu0 %2003
        %2007 = vrot.lane.b32.xlu0 %v2000, 16
        %v2008 = vpop.permute.xlu0 %2007
        %2011 = vrot.lane.b32.xlu0 %v2001, 24
        %v2012 = vpop.permute.xlu0 %2011
        %v2014 = vsel %vm1211, %v1998, %v2004
        %vm2015 = vcmask 130048
        %v2016 = vsel %vm2015, %v2014, %v2008
        %vm2017 = vcmask 195584
        %v2018 = vsel %vm2017, %v2016, %v2012
        %v2019 = vld [vmem:[%s5] sm:$0xff]
        %v2020 = vld [vmem:[%s5 + $0x8] sm:$0xff]
        %v2021 = vld [vmem:[%s5 + $0x10] sm:$0xff]
        %v2022 = vld [vmem:[%s5 + $0x18] sm:$0xff]
        %v2023 = vld [vmem:[%s6] sm:$0x1]
        %v2025 = vlaneseq
        %v2026 = vshrl.u32 %v2025, 7
        %v2027 = vsub.s32 0, %v2026
        %v2028 = vrot.slane %v2023, %v2027
        %v2031 = vsel %vm986, %v2018, 0
        %2033 = vmatprep.subr.mxu0 0.0
        %2034 = vmatpush1.msra.mxu0 %v2019
        %2035 = vmatprep.subr.mxu0 0.0
        %2036 = vmatpush1.msra.mxu0 %v2020
        %2037 = vmatprep.subr.mxu0 0.0
        %2038 = vmatpush1.msra.mxu0 %v2021
        %2039 = vmatprep.subr.mxu0 0.0
        %2040 = vmatpush1.msra.mxu0 %v2022
        %2041 = vmatprep.subr.mxu0 0.0
        %2042 = vmatpush1.msra.mxu0 0.0
        %2043 = vmatprep.subr.mxu0 0.0
        %2044 = vmatpush1.msra.mxu0 0.0
        %2045 = vmatprep.subr.mxu0 0.0
        %2046 = vmatpush1.msra.mxu0 0.0
        %2047 = vmatprep.subr.mxu0 0.0
        %2048 = vmatpush1.msra.mxu0 0.0
        %2049 = vmatprep.subr.mxu0 0.0
        %2050 = vmatpush1.msra.mxu0 0.0
        %2051 = vmatprep.subr.mxu0 0.0
        %2052 = vmatpush1.msra.mxu0 0.0
        %2053 = vmatprep.subr.mxu0 0.0
        %2054 = vmatpush1.msra.mxu0 0.0
        %2055 = vmatprep.subr.mxu0 0.0
        %2056 = vmatpush1.msra.mxu0 0.0
        %2057 = vmatprep.subr.mxu0 0.0
        %2058 = vmatpush1.msra.mxu0 0.0
        %2059 = vmatprep.subr.mxu0 0.0
        %2060 = vmatpush1.msra.mxu0 0.0
        %2061 = vmatprep.subr.mxu0 0.0
        %2062 = vmatpush1.msra.mxu0 0.0
        %2063 = vmatprep.subr.mxu0 0.0
        %2064 = vmatpush1.msra.mxu0 0.0
        %2065 = vmatprep.subr.mxu0 0.0
        %2066 = vmatpush1.msra.mxu0 0.0
        %2067 = vmatprep.subr.mxu0 0.0
        %2068 = vmatpush1.msra.mxu0 0.0
        %2069 = vmatprep.subr.mxu0 0.0
        %2070 = vmatpush1.msra.mxu0 0.0
        %2071 = vmatprep.subr.mxu0 0.0
        %2072 = vmatpush1.msra.mxu0 0.0
        %2073 = vmatprep.subr.mxu0 0.0
        %2074 = vmatpush1.msra.mxu0 0.0
        %2075 = vmatprep.subr.mxu0 0.0
        %2076 = vmatpush1.msra.mxu0 0.0
        %2077 = vmatprep.subr.mxu0 0.0
        %2078 = vmatpush1.msra.mxu0 0.0
        %2079 = vmatprep.subr.mxu0 0.0
        %2080 = vmatpush1.msra.mxu0 0.0
        %2081 = vmatprep.subr.mxu0 0.0
        %2082 = vmatpush1.msra.mxu0 0.0
        %2083 = vmatprep.subr.mxu0 0.0
        %2084 = vmatpush1.msra.mxu0 0.0
        %2085 = vmatprep.subr.mxu0 0.0
        %2086 = vmatpush1.msra.mxu0 0.0
        %2087 = vmatprep.subr.mxu0 0.0
        %2088 = vmatpush1.msra.mxu0 0.0
        %2089 = vmatprep.subr.mxu0 0.0
        %2090 = vmatpush1.msra.mxu0 0.0
        %2091 = vmatprep.subr.mxu0 0.0
        %2092 = vmatpush1.msra.mxu0 0.0
        %2093 = vmatprep.subr.mxu0 0.0
        %2094 = vmatpush1.msra.mxu0 0.0
        %2095 = vmatprep.subr.mxu0 0.0
        %2096 = vmatpush1.msra.mxu0 0.0
        %2097 = vmatprep.mubr.f32.mxu0 0.0
        %2098 = vmatmul.mubr.f32.gmra.mrb[0].mxu0 %v2031
        %v2099 = vpop.f32.mrb[0].mxu0
        %v2100 = vadd.f32 %v2028, %v2099
        %v2101 = vpop.f32.mrb[0].mxu0
        %2102 = vdwg.mxu0
        %v2103 = vadd.f32 %v2100, %v974
        %v2104 = vsel %vm986, %v2103, 0.0
        %2105 = vadd.xlane.f32.xlu0 %v2104
        %v2106 = vpop.xlane.xlu0 %2105
        %v2107 = vrcp.pop 32.0
        %v2108 = vmul.f32 %v2106, %v2107
        %v2109 = vsub.f32 %v2103, %v2108
        %v2110 = vmul.f32 %v2109, %v2109
        %v2111 = vsel %vm986, %v2110, 0.0
        %2112 = vadd.xlane.f32.xlu0 %v2111
        %v2113 = vpop.xlane.xlu0 %2112
        %v2114 = vmul.f32 %v2113, %v2107
        %v2115 = vadd.f32 %v2114, 1e-05
        %v2116 = vrsqrt.pop %v2115
        %v2117 = vmul.f32 %v2109, %v2116
        %v2118 = vld [vmem:[%s7] sm:$0x1]
        %v2120 = vlaneseq
        %v2121 = vshrl.u32 %v2120, 7
        %v2122 = vsub.s32 0, %v2121
        %v2123 = vrot.slane %v2118, %v2122
        %v2125 = vmul.f32 %v2117, %v2123
        %v2126 = vld [vmem:[%s8] sm:$0x1]
        %v2128 = vlaneseq
        %v2129 = vshrl.u32 %v2128, 7
        %v2130 = vsub.s32 0, %v2129
        %v2131 = vrot.slane %v2126, %v2130
        %v2133 = vadd.f32 %v2125, %v2131
        %v2134 = vld [vmem:[#allocation7] sm:$0xff]
        %v2135 = vld [vmem:[#allocation7 + $0x8] sm:$0xff]
        %v2136 = vld [vmem:[#allocation7 + $0x10] sm:$0xff]
        %v2137 = vld [vmem:[#allocation7 + $0x18] sm:$0xff]
        %v2138 = vld [vmem:[%s10] sm:$0x1]
        %v2140 = vlaneseq
        %v2141 = vshrl.u32 %v2140, 7
        %v2142 = vsub.s32 0, %v2141
        %v2143 = vrot.slane %v2138, %v2142
        %v2146 = vsel %vm986, %v2133, 0
        %2148 = vmatprep.subr.mxu0 0.0
        %2149 = vmatpush1.msra.mxu0 %v2134
        %2150 = vmatprep.subr.mxu0 0.0
        %2151 = vmatpush1.msra.mxu0 %v2135
        %2152 = vmatprep.subr.mxu0 0.0
        %2153 = vmatpush1.msra.mxu0 %v2136
        %2154 = vmatprep.subr.mxu0 0.0
        %2155 = vmatpush1.msra.mxu0 %v2137
        %2156 = vmatprep.subr.mxu0 0.0
        %2157 = vmatpush1.msra.mxu0 0.0
        %2158 = vmatprep.subr.mxu0 0.0
        %2159 = vmatpush1.msra.mxu0 0.0
        %2160 = vmatprep.subr.mxu0 0.0
        %2161 = vmatpush1.msra.mxu0 0.0
        %2162 = vmatprep.subr.mxu0 0.0
        %2163 = vmatpush1.msra.mxu0 0.0
        %2164 = vmatprep.subr.mxu0 0.0
        %2165 = vmatpush1.msra.mxu0 0.0
        %2166 = vmatprep.subr.mxu0 0.0
        %2167 = vmatpush1.msra.mxu0 0.0
        %2168 = vmatprep.subr.mxu0 0.0
        %2169 = vmatpush1.msra.mxu0 0.0
        %2170 = vmatprep.subr.mxu0 0.0
        %2171 = vmatpush1.msra.mxu0 0.0
        %2172 = vmatprep.subr.mxu0 0.0
        %2173 = vmatpush1.msra.mxu0 0.0
        %2174 = vmatprep.subr.mxu0 0.0
        %2175 = vmatpush1.msra.mxu0 0.0
        %2176 = vmatprep.subr.mxu0 0.0
        %2177 = vmatpush1.msra.mxu0 0.0
        %2178 = vmatprep.subr.mxu0 0.0
        %2179 = vmatpush1.msra.mxu0 0.0
        %2180 = vmatprep.subr.mxu0 0.0
        %2181 = vmatpush1.msra.mxu0 0.0
        %2182 = vmatprep.subr.mxu0 0.0
        %2183 = vmatpush1.msra.mxu0 0.0
        %2184 = vmatprep.subr.mxu0 0.0
        %2185 = vmatpush1.msra.mxu0 0.0
        %2186 = vmatprep.subr.mxu0 0.0
        %2187 = vmatpush1.msra.mxu0 0.0
        %2188 = vmatprep.subr.mxu0 0.0
        %2189 = vmatpush1.msra.mxu0 0.0
        %2190 = vmatprep.subr.mxu0 0.0
        %2191 = vmatpush1.msra.mxu0 0.0
        %2192 = vmatprep.subr.mxu0 0.0
        %2193 = vmatpush1.msra.mxu0 0.0
        %2194 = vmatprep.subr.mxu0 0.0
        %2195 = vmatpush1.msra.mxu0 0.0
        %2196 = vmatprep.subr.mxu0 0.0
        %2197 = vmatpush1.msra.mxu0 0.0
        %2198 = vmatprep.subr.mxu0 0.0
        %2199 = vmatpush1.msra.mxu0 0.0
        %2200 = vmatprep.subr.mxu0 0.0
        %2201 = vmatpush1.msra.mxu0 0.0
        %2202 = vmatprep.subr.mxu0 0.0
        %2203 = vmatpush1.msra.mxu0 0.0
        %2204 = vmatprep.subr.mxu0 0.0
        %2205 = vmatpush1.msra.mxu0 0.0
        %2206 = vmatprep.subr.mxu0 0.0
        %2207 = vmatpush1.msra.mxu0 0.0
        %2208 = vmatprep.subr.mxu0 0.0
        %2209 = vmatpush1.msra.mxu0 0.0
        %2210 = vmatprep.subr.mxu0 0.0
        %2211 = vmatpush1.msra.mxu0 0.0
        %2212 = vmatprep.mubr.f32.mxu0 0.0
        %2213 = vmatmul.mubr.f32.gmra.mrb[0].mxu0 %v2146
        %v2214 = vpop.f32.mrb[0].mxu0
        %v2215 = vadd.f32 %v2143, %v2214
        %v2216 = vpop.f32.mrb[0].mxu0
        %2217 = vdwg.mxu0
        %v2218 = vmax.f32 %v2215, 0.0
        %v2219 = vld [vmem:[%s11] sm:$0xff]
        %v2220 = vld [vmem:[%s11 + $0x8] sm:$0xff]
        %v2221 = vld [vmem:[%s11 + $0x10] sm:$0xff]
        %v2222 = vld [vmem:[%s11 + $0x18] sm:$0xff]
        %v2223 = vld [vmem:[%s11 + $0x20] sm:$0xff]
        %v2224 = vld [vmem:[%s11 + $0x28] sm:$0xff]
        %v2225 = vld [vmem:[%s11 + $0x30] sm:$0xff]
        %v2226 = vld [vmem:[%s11 + $0x38] sm:$0xff]
        %v2227 = vld [vmem:[%s12] sm:$0x1]
        %v2229 = vlaneseq
        %v2230 = vshrl.u32 %v2229, 7
        %v2231 = vsub.s32 0, %v2230
        %v2232 = vrot.slane %v2227, %v2231
        %vm2234 = vcmask 523264
        %v2236 = vsel %vm2234, %v2218, 0
        %2238 = vmatprep.subr.mxu0 0.0
        %2239 = vmatpush1.msra.mxu0 %v2219
        %2240 = vmatprep.subr.mxu0 0.0
        %2241 = vmatpush1.msra.mxu0 %v2220
        %2242 = vmatprep.subr.mxu0 0.0
        %2243 = vmatpush1.msra.mxu0 %v2221
        %2244 = vmatprep.subr.mxu0 0.0
        %2245 = vmatpush1.msra.mxu0 %v2222
        %2246 = vmatprep.subr.mxu0 0.0
        %2247 = vmatpush1.msra.mxu0 %v2223
        %2248 = vmatprep.subr.mxu0 0.0
        %2249 = vmatpush1.msra.mxu0 %v2224
        %2250 = vmatprep.subr.mxu0 0.0
        %2251 = vmatpush1.msra.mxu0 %v2225
        %2252 = vmatprep.subr.mxu0 0.0
        %2253 = vmatpush1.msra.mxu0 %v2226
        %2254 = vmatprep.subr.mxu0 0.0
        %2255 = vmatpush1.msra.mxu0 0.0
        %2256 = vmatprep.subr.mxu0 0.0
        %2257 = vmatpush1.msra.mxu0 0.0
        %2258 = vmatprep.subr.mxu0 0.0
        %2259 = vmatpush1.msra.mxu0 0.0
        %2260 = vmatprep.subr.mxu0 0.0
        %2261 = vmatpush1.msra.mxu0 0.0
        %2262 = vmatprep.subr.mxu0 0.0
        %2263 = vmatpush1.msra.mxu0 0.0
        %2264 = vmatprep.subr.mxu0 0.0
        %2265 = vmatpush1.msra.mxu0 0.0
        %2266 = vmatprep.subr.mxu0 0.0
        %2267 = vmatpush1.msra.mxu0 0.0
        %2268 = vmatprep.subr.mxu0 0.0
        %2269 = vmatpush1.msra.mxu0 0.0
        %2270 = vmatprep.subr.mxu0 0.0
        %2271 = vmatpush1.msra.mxu0 0.0
        %2272 = vmatprep.subr.mxu0 0.0
        %2273 = vmatpush1.msra.mxu0 0.0
        %2274 = vmatprep.subr.mxu0 0.0
        %2275 = vmatpush1.msra.mxu0 0.0
        %2276 = vmatprep.subr.mxu0 0.0
        %2277 = vmatpush1.msra.mxu0 0.0
        %2278 = vmatprep.subr.mxu0 0.0
        %2279 = vmatpush1.msra.mxu0 0.0
        %2280 = vmatprep.subr.mxu0 0.0
        %2281 = vmatpush1.msra.mxu0 0.0
        %2282 = vmatprep.subr.mxu0 0.0
        %2283 = vmatpush1.msra.mxu0 0.0
        %2284 = vmatprep.subr.mxu0 0.0
        %2285 = vmatpush1.msra.mxu0 0.0
        %2286 = vmatprep.subr.mxu0 0.0
        %2287 = vmatpush1.msra.mxu0 0.0
        %2288 = vmatprep.subr.mxu0 0.0
        %2289 = vmatpush1.msra.mxu0 0.0
        %2290 = vmatprep.subr.mxu0 0.0
        %2291 = vmatpush1.msra.mxu0 0.0
        %2292 = vmatprep.subr.mxu0 0.0
        %2293 = vmatpush1.msra.mxu0 0.0
        %2294 = vmatprep.subr.mxu0 0.0
        %2295 = vmatpush1.msra.mxu0 0.0
        %2296 = vmatprep.subr.mxu0 0.0
        %2297 = vmatpush1.msra.mxu0 0.0
        %2298 = vmatprep.subr.mxu0 0.0
        %2299 = vmatpush1.msra.mxu0 0.0
        %2300 = vmatprep.subr.mxu0 0.0
        %2301 = vmatpush1.msra.mxu0 0.0
        %2302 = vmatprep.mubr.f32.mxu0 0.0
        %2303 = vmatmul.mubr.f32.gmra.mrb[0].mxu0 %v2236
        %v2304 = vpop.f32.mrb[0].mxu0
        %v2305 = vadd.f32 %v2232, %v2304
        %v2306 = vpop.f32.mrb[0].mxu0
        %2307 = vdwg.mxu0
        %v2308 = vadd.f32 %v2305, %v2133
        %v2309 = vsel %vm986, %v2308, 0.0
        %2310 = vadd.xlane.f32.xlu0 %v2309
        %v2311 = vpop.xlane.xlu0 %2310
        %v2312 = vmul.f32 %v2311, %v2107
        %v2313 = vsub.f32 %v2308, %v2312
        %v2314 = vmul.f32 %v2313, %v2313
        %v2315 = vsel %vm986, %v2314, 0.0
        %2316 = vadd.xlane.f32.xlu0 %v2315
        %v2317 = vpop.xlane.xlu0 %2316
        %v2318 = vmul.f32 %v2317, %v2107
        %v2319 = vadd.f32 %v2318, 1e-05
        %v2320 = vrsqrt.pop %v2319
        %v2321 = vmul.f32 %v2313, %v2320
        %v2322 = vld [vmem:[%s13] sm:$0x1]
        %v2324 = vlaneseq
        %v2325 = vshrl.u32 %v2324, 7
        %v2326 = vsub.s32 0, %v2325
        %v2327 = vrot.slane %v2322, %v2326
        %v2329 = vmul.f32 %v2321, %v2327
        %v2330 = vld [vmem:[%s14] sm:$0x1]
        %v2332 = vlaneseq
        %v2333 = vshrl.u32 %v2332, 7
        %v2334 = vsub.s32 0, %v2333
        %v2335 = vrot.slane %v2330, %v2334
        %v2337 = vadd.f32 %v2329, %v2335
        %2338 = vst.msk [vmem:[%s571] sm:$0xff] %vm986, %v2337
        %s2339 = sand.u32 %s380, 1
        %s2340 = scalar_lea.sflag [#allocation6], %s2339
        %s2341 = sand.u32 %s380, 1
        %s2342 = smul.addr %s2341, 8
        %s2343 = scalar_lea.vmem [#allocation9], %s2342
        %s2344 = sand.u32 %s408, 1
        %s2345 = scalar_lea.sflag [#allocation11], %s2344
        %s2346 = sand.u32 %s408, 1
        %s2347 = smul.addr %s2346, 8
        %s2348 = scalar_lea.vmem [#allocation10], %s2347
        // Predicated region
        $region93: #{tpu_custom_call.1} parent=79 // pred_check
          %p2349 = pneg %p390
        $region94: #{tpu_custom_call.1} parent=79 // pred_check_branch
          %2351 = sbr.rel (%p2349) target = $region96
        $region95: #{tpu_custom_call.1} parent=79 // pred_region
          %s2353 = ssub.s32 128, 128
          %2354 = vsyncadd %s2340, %s2353
          %s2355 = sadd.s32 %s43, %s42
          %s2356 = smul.addr %s2355, 128
          %s2357 = scalar_lea.hbm %s15, %s2356
          %s2359 = sshll.u32 %s2343, 4
          %s2360 = int_to_ptr.vmem [resolvable:$true] %s2359
          %2362 = dma.vmem_to_hbm [thread:$0]  %s2360, 128, %s2357, %s2340
        $region96: #{tpu_custom_call.1} parent=79 // pred_fallthru
          _
        // Predicated region
        $region97: #{tpu_custom_call.1} parent=79 // pred_check
          %p2363 = pneg %p418
        $region98: #{tpu_custom_call.1} parent=79 // pred_check_branch
          %2365 = sbr.rel (%p2363) target = $region100
        $region99: #{tpu_custom_call.1} parent=79 // pred_region
          %s2367 = ssub.s32 128, 128
          %2368 = vsyncadd %s2345, %s2367
          %s2369 = sadd.s32 %s43, %s42
          %s2370 = smul.addr %s2369, 128
          %s2371 = scalar_lea.hbm %s16, %s2370
          %s2373 = sshll.u32 %s2348, 4
          %s2374 = int_to_ptr.vmem [resolvable:$true] %s2373
          %2376 = dma.vmem_to_hbm [thread:$0]  %s2374, 128, %s2371, %s2345
        $region100: #{tpu_custom_call.1} parent=79 // pred_fallthru
          _
      $region80: #{tpu_custom_call.1} parent=5 // pred_fallthru
        _
      %p2377 = scmp.le.s32.totalorder 2, %s33
      // Predicated region
      $region101: #{tpu_custom_call.1} parent=5 // pred_check
        %p2378 = pneg %p2377
      $region102: #{tpu_custom_call.1} parent=5 // pred_check_branch
        %2380 = sbr.rel (%p2378) target = $region104
      $region103: #{tpu_custom_call.1} parent=5 // pred_region
        %s2381 = ssub.s32 %s33, 2
        // Predicated region
        $region105: #{tpu_custom_call.1} parent=103 // pred_check
          %p2382 = pneg %p396
        $region106: #{tpu_custom_call.1} parent=103 // pred_check_branch
          %2384 = sbr.rel (%p2382) target = $region108
        $region107: #{tpu_custom_call.1} parent=103 // pred_region
          %s2385 = sand.u32 %s381, 1
          %s2386 = scalar_lea.sflag [#allocation6], %s2385
          %s2387 = sand.u32 %s381, 1
          %s2388 = smul.addr %s2387, 8
          %s2389 = scalar_lea.vmem [#allocation9], %s2388
          %2390 = dma.done %s2386, 128
        $region108: #{tpu_custom_call.1} parent=103 // pred_fallthru
          _
        // Predicated region
        $region109: #{tpu_custom_call.1} parent=103 // pred_check
          %p2391 = pneg %p424
        $region110: #{tpu_custom_call.1} parent=103 // pred_check_branch
          %2393 = sbr.rel (%p2391) target = $region112
        $region111: #{tpu_custom_call.1} parent=103 // pred_region
          %s2394 = sand.u32 %s409, 1
          %s2395 = scalar_lea.sflag [#allocation11], %s2394
          %s2396 = sand.u32 %s409, 1
          %s2397 = smul.addr %s2396, 8
          %s2398 = scalar_lea.vmem [#allocation10], %s2397
          %2399 = dma.done %s2395, 128
        $region112: #{tpu_custom_call.1} parent=103 // pred_fallthru
          _
      $region104: #{tpu_custom_call.1} parent=5 // pred_fallthru
        _
    $region6: #{tpu_custom_call.1} parent=1 // loop_footer
      %s37 = sadd.s32 1, %s33
    $region7: #{tpu_custom_call.1} parent=1 // loop_footer_branch
      %32 = sbr.rel target = $region3
    $region8: #{tpu_custom_call.1} parent=1 // loop_exit
      _
    %2400 = vsyncpa [#allocation5], 1
    %s2401 = scalar_lea.sflag [#allocation5], 1
    %2402 = vsyncpa %s2401, 1
    %2403 = vsyncpa [#allocation8], 1
    %2404 = vsyncpa [#allocation6], 1
    %s2405 = scalar_lea.sflag [#allocation6], 1
    %2406 = vsyncpa %s2405, 1
    %2407 = vsyncpa [#allocation11], 1
    %s2408 = scalar_lea.sflag [#allocation11], 1
    %2409 = vsyncpa %s2408, 1

</llo_original>
